<compile_context>
chip_gen: v6e
topology: v6e:2x2x1
jax: 0.10.0
libtpu: 0.0.40
codegen_flags: <defaults>
</compile_context>

<pallas_src>
import jax
import jax.numpy as jnp
import numpy as np
from jax import lax
from jax.experimental import pallas as pl
from jax.experimental.pallas import tpu as pltpu


def _round_up(x, mult):
    return ((x + mult - 1) // mult) * mult


def _tpu_vmem_capacity_bytes():
    try:
        cap = getattr(pltpu.get_tpu_info(), "vmem_capacity_bytes", None)
        if cap:
            return int(cap)
    except Exception:
        pass
    return 64 * 1024 * 1024   # conservative default (v7x per-TensorCore VMEM)


# ----------------------------------------------------------------------------
# Fused kernel factory.  Ref order per grid step (b, t):
#   has_known : u_cat (16, n_t) bf16, k_cat (m, 16) bf16, |u|^2 (1, n_t) f32,
#               |k|^2 (m, 1) f32, known_feats (C2, m) bf16
#   else      : known_feats (C2, 1 or n_t) f32
#   has_skip  : skip (C1, n_t) f32
#   per layer : layer 0 w/ skip -> (W_interp bf16, W_skip bf16, shift f32) else (W bf16, shift f32)
#   out (C_last, n_t)
# ----------------------------------------------------------------------------
def _make_fused_fp_kernel(num_layers, has_skip, has_known):
    def kernel(*refs):
        out_ref = refs[-1]
        n_t = out_ref.shape[-1]
        it = iter(refs[:-1])

        if has_known:
            ucat_ref = next(it)    # (16, n_t) bf16: [u_hi ; u_lo ; u_hi ; 0-pad]
            kcat_ref = next(it)    # (m, 16)   bf16: [k_hi | k_hi | k_lo | 0-pad]
            usq_ref = next(it)     # (1, n_t)  f32
            ksq_ref = next(it)     # (m, 1)    f32
            kfeat_ref = next(it)   # (C2, m)   bf16
        else:
            interp_ref = next(it)  # (C2, 1) or (C2, n_t) f32
        skip_ref = next(it) if has_skip else None
        layer_refs = []
        for li in range(num_layers):
            layer_refs.append(tuple(next(it)
                                    for _ in range(3 if (li == 0 and has_skip) else 2)))

        # ---- three_nn + three_interpolate ----
        if has_known:
            # Cross term on the MXU (bf16 hi/lo split, f32 accumulation) -> ~f32-accurate d^2
            # with only 2 VPU ops per (m, n_t) element instead of ~8.
            cross = jnp.dot(kcat_ref[...], ucat_ref[...],
                            preferred_element_type=jnp.float32)          # (m, n_t)
            dist2 = ksq_ref[...] + usq_ref[...] - 2.0 * cross

            m_pts = dist2.shape[0]
            row = lax.broadcasted_iota(jnp.int32, (m_pts, n_t), 0)
            BIG = jnp.float32(1e30)

            def top1(dmat):
                dmin = jnp.min(dmat, axis=0, keepdims=True)              # (1, n_t)
                imin = jnp.min(jnp.where(dmat == dmin, row, m_pts),      # lowest index on ties
                               axis=0, keepdims=True)
                return dmin, row == imin                                 # value + one-hot mask

            # TODO(synk): for very large m, switch to an m-chunked running top-3 (fori_loop with
            #             (1, n_t) carries) so dist2 / masks never materialize at full (m, n_t).
            d1, s1 = top1(dist2)
            masked = jnp.where(s1, BIG, dist2)
            d2, s2 = top1(masked)
            masked = jnp.where(s2, BIG, masked)
            d3, s3 = top1(masked)

            # Inverse-(squared)-distance weights on the EUP.  Clamp the selected distances at 0
            # (the expanded form can round slightly negative for coincident points).  The two
            # chained approx reciprocals mean the weights sum to 1 only to ~1e-3.
            w1 = pl.reciprocal(jnp.maximum(d1, 0.0) + 1e-8, approx=True)
            w2 = pl.reciprocal(jnp.maximum(d2, 0.0) + 1e-8, approx=True)
            w3 = pl.reciprocal(jnp.maximum(d3, 0.0) + 1e-8, approx=True)
            inv_norm = pl.reciprocal(w1 + w2 + w3, approx=True)
            w1 = w1 * inv_norm
            w2 = w2 * inv_norm
            w3 = w3 * inv_norm

            # Dense (m, n_t) interpolation-weight matrix built by reusing the top-3 one-hot masks
            # (3 nested selects, no adds) -> a single bf16 MXU matmul against known_feats.
            wmat = jnp.where(s1, w1, jnp.where(s2, w2, jnp.where(s3, w3, 0.0)))
            interp = jnp.dot(kfeat_ref[...], wmat.astype(jnp.bfloat16),
                             preferred_element_type=jnp.float32)         # (C2, n_t) f32
        else:
            v = interp_ref[...].astype(jnp.float32)
            interp = jnp.broadcast_to(v, (v.shape[0], n_t)) if v.shape[-1] == 1 else v

        # ---- shared MLP: 1x1 conv (BN scale folded into W) + shift + ReLU ----
        x = interp
        for li in range(num_layers):
            if li == 0 and has_skip:
                wi_ref, ws_ref, sh_ref = layer_refs[0]
                y = jnp.dot(wi_ref[...], x.astype(jnp.bfloat16),
                            preferred_element_type=jnp.float32)
                y = y + jnp.dot(ws_ref[...], skip_ref[...].astype(jnp.bfloat16),
                                preferred_element_type=jnp.float32)
            else:
                w_ref, sh_ref = layer_refs[li]
                y = jnp.dot(w_ref[...], x.astype(jnp.bfloat16),
                            preferred_element_type=jnp.float32)
            x = jnp.maximum(y + sh_ref[...], 0.0)

        out_ref[...] = x.astype(out_ref.dtype)                           # lane-dense store

    return kernel


# ----------------------------------------------------------------------------
# Wrapper: PointnetFPModule.forward
#   params       : list of (W (Cout, Cin), scale (Cout,), shift (Cout,)); eval-mode BN folded.
#   unknown      : (B, n, 3); known : (B, m, 3) or None
#   unknow_feats : (B, C1, n) or None; known_feats : (B, C2, m)  (or (B, C2, 1) if known is None)
# Returns (B, mlp[-1], n).
# ----------------------------------------------------------------------------
def pointnet_fp_forward(params, unknown, known, unknow_feats, known_feats,
                        out_dtype=jnp.float32):
    assert len(params) >= 1, "mlp must have at least one layer"
    f32, bf16 = jnp.float32, jnp.bfloat16
    B, n, _ = unknown.shape
    has_known = known is not None
    has_skip = unknow_feats is not None
    num_layers = len(params)
    C2 = known_feats.shape[1]
    C1 = unknow_feats.shape[1] if has_skip else 0
    c_last = params[-1][0].shape[0]
    c_max = max(p[0].shape[0] for p in params)
    m = known.shape[1] if has_known else 0
    if has_known:
        assert m >= 3, "three_nn needs at least 3 known points"

    # ---- generation/VMEM-aware n tiling (v5e/v6e: 128 MiB VMEM, v7x: 64 MiB) ----
    vmem_cap = _tpu_vmem_capacity_bytes()
    budget = int(0.55 * vmem_cap)
    out_isz = np.dtype(out_dtype).itemsize

    def vmem_est(nt):
        b = 0
        if has_known:
            b += 9 * m * nt * 4 + m * nt * 2                   # 3-NN intermediates + bf16 wmat
            b += 2 * (m * 16 * 2 + m * 4 + C2 * m * 2)         # resident k_cat / |k|^2 / kfeat
            b += 2 * (16 * nt * 2 + nt * 4)                    # streamed u_cat / |u|^2
        else:
            b += C2 * nt * 4 + 2 * C2 * 4
        if has_skip:
            b += 2 * C1 * nt * 4 + C1 * nt * 2
        b += 2 * c_last * nt * out_isz                         # double-buffered output blocks
        b += (3 * c_max + C2) * nt * 4                         # live MLP activations
        return b

    n128 = _round_up(n, 128)
    n_tile = 128
    for cand in (4096, 2048, 1024, 512, 256):
        if cand <= n128 and vmem_est(cand) <= budget:
            n_tile = cand
            break
    n_pad = _round_up(n, n_tile)
    n_tiles = n_pad // n_tile
    pad_n = n_pad - n

    in_arrays, in_specs = [], []
    if has_known:
        u_t = jnp.transpose(unknown, (0, 2, 1)).astype(f32)        # (B, 3, n)   (tiny transpose)
        k_t = known.astype(f32)                                    # (B, m, 3)
        u_sq = jnp.sum(u_t * u_t, axis=1, keepdims=True)           # (B, 1, n)  exact f32 norms
        k_sq = jnp.sum(k_t * k_t, axis=2, keepdims=True)           # (B, m, 1)
        # bf16 hi/lo split so the O(m*n) cross term is ONE bf16 MXU matmul at ~f32 accuracy:
        #   k.u = k_hi.u_hi + k_hi.u_lo + k_lo.u_hi  (+ O(2^-17) dropped lo.lo term)
        u_hi = u_t.astype(bf16)
        u_lo = (u_t - u_hi.astype(f32)).astype(bf16)
        k_hi = k_t.astype(bf16)
        k_lo = (k_t - k_hi.astype(f32)).astype(bf16)
        u_cat = jnp.concatenate([u_hi, u_lo, u_hi], axis=1)        # (B, 9, n)
        k_cat = jnp.concatenate([k_hi, k_hi, k_lo], axis=2)        # (B, m, 9)
        u_cat = jnp.pad(u_cat, ((0, 0), (0, 7), (0, pad_n)))       # (B, 16, n_pad)
        k_cat = jnp.pad(k_cat, ((0, 0), (0, 0), (0, 7)))           # (B, m, 16)
        u_sq = jnp.pad(u_sq, ((0, 0), (0, 0), (0, pad_n)))         # (B, 1, n_pad)
        kfeat = known_feats.astype(bf16)                           # (B, C2, m)
        in_arrays += [u_cat, k_cat, u_sq, k_sq, kfeat]
        in_specs += [
            pl.BlockSpec((None, 16, n_tile), lambda b, t: (b, 0, t)),
            pl.BlockSpec((None, m, 16), lambda b, t: (b, 0, 0)),    # resident across n tiles
            pl.BlockSpec((None, 1, n_tile), lambda b, t: (b, 0, t)),
            pl.BlockSpec((None, m, 1), lambda b, t: (b, 0, 0)),     # resident
            pl.BlockSpec((None, C2, m), lambda b, t: (b, 0, 0)),    # resident
        ]
    else:
        # PyTorch path: known_feats.expand(..., n) when known is None.  Do NOT materialize the
        # (B, C2, n) broadcast in HBM: keep the (B, C2, 1) source resident, broadcast in VMEM.
        mk = known_feats.shape[2]
        kf = known_feats.astype(f32)
        if mk == 1:
            in_arrays += [kf]
            in_specs += [pl.BlockSpec((None, C2, 1), lambda b, t: (b, 0, 0))]
        else:
            assert mk == n, "known_feats last dim must be 1 or n when known is None"
            if pad_n:
                kf = jnp.pad(kf, ((0, 0), (0, 0), (0, pad_n)))
            in_arrays += [kf]
            in_specs += [pl.BlockSpec((None, C2, n_tile), lambda b, t: (b, 0, t))]

    if has_skip:
        skip = unknow_feats.astype(f32)
        if pad_n:
            skip = jnp.pad(skip, ((0, 0), (0, 0), (0, pad_n)))
        in_arrays.append(skip)
        in_specs.append(pl.BlockSpec((None, C1, n_tile), lambda b, t: (b, 0, t)))

    # Layer params: eval-mode BN scale folded into the weights (W' = scale * W), cast bf16 for
    # the MXU; shift (BN beta / conv bias) stays f32.  Concat fused: W0 split into W_interp|W_skip.
    for li, (w, scale, shift) in enumerate(params):
        cout = w.shape[0]
        wf = jnp.asarray(w, f32) * jnp.asarray(scale, f32).reshape(cout, 1)
        sh = jnp.asarray(shift, f32).reshape(cout, 1)
        if li == 0 and has_skip:
            wi = wf[:, :C2].astype(bf16)
            ws = wf[:, C2:].astype(bf16)
            in_arrays += [wi, ws, sh]
            in_specs += [pl.BlockSpec(wi.shape, lambda b, t: (0, 0)),   # grid-invariant, in VMEM
                         pl.BlockSpec(ws.shape, lambda b, t: (0, 0)),
                         pl.BlockSpec(sh.shape, lambda b, t: (0, 0))]
        else:
            wb = wf.astype(bf16)
            in_arrays += [wb, sh]
            in_specs += [pl.BlockSpec(wb.shape, lambda b, t: (0, 0)),
                         pl.BlockSpec(sh.shape, lambda b, t: (0, 0))]

    kernel = _make_fused_fp_kernel(num_layers, has_skip, has_known)

    # TODO(synk): training-mode BatchNorm (batch statistics) is not implemented; BN is folded
    #             with eval-mode running stats into the weights/shift.
    out = pl.pallas_call(
        kernel,
        out_shape=jax.ShapeDtypeStruct((B, c_last, n_pad), out_dtype),
        grid=(B, n_tiles),
        in_specs=in_specs,
        out_specs=pl.BlockSpec((None, c_last, n_tile), lambda b, t: (b, 0, t)),
        compiler_params=pltpu.CompilerParams(
            dimension_semantics=("parallel", "parallel"),
            vmem_limit_bytes=min(int(0.85 * vmem_cap), 100 * 1024 * 1024)),
    )(*in_arrays)
    return out[:, :, :n] if pad_n else out


# ----------------------------------------------------------------------------
# Pure-JAX reference for correctness checking
# ----------------------------------------------------------------------------
def reference_forward(params, unknown, known, unknow_feats, known_feats):
    B, n, _ = unknown.shape
    if known is not None:
        d2 = jnp.sum((unknown[:, :, None, :] - known[:, None, :, :]) ** 2, axis=-1)   # (B,n,m)
        vals, idx = lax.top_k(-d2, 3)
        dist = -vals
        w = 1.0 / (dist + 1e-8)
        w = w / jnp.sum(w, axis=-1, keepdims=True)
        kft = jnp.transpose(known_feats, (0, 2, 1))                                    # (B,m,C2)
        gathered = jnp.take_along_axis(kft[:, None, :, :], idx[:, :, :, None], axis=2)
        x = jnp.sum(gathered * w[..., None], axis=2)                                   # (B,n,C2)
    else:
        x = jnp.broadcast_to(jnp.transpose(known_feats, (0, 2, 1)),
                             (B, n, known_feats.shape[1]))
    if unknow_feats is not None:
        x = jnp.concatenate([x, jnp.transpose(unknow_feats, (0, 2, 1))], axis=-1)
    for (wm, scale, shift) in params:                                                  # wm: (Cout, Cin)
        x = jnp.maximum((x @ wm.T) * scale + shift, 0.0)
    return jnp.transpose(x, (0, 2, 1))                                                 # (B,Cout,n)


if __name__ == "__main__":
    key = jax.random.PRNGKey(0)
    B, n, m, C1, C2 = 2, 384, 16, 4, 8          # n pads 384 -> 512 (two 256-wide lane tiles)
    mlp = [C1 + C2, 32, 16]

    k1, k2, k3, k4, k5, k6, k7 = jax.random.split(key, 7)
    unknown = jax.random.uniform(k1, (B, n, 3), jnp.float32)        # (B, n, 3)
    known = jax.random.uniform(k2, (B, m, 3), jnp.float32)          # (B, m, 3)
    unknow_feats = jax.random.normal(k3, (B, C1, n), jnp.float32)   # (B, C1, n)
    known_feats = jax.random.normal(k4, (B, C2, m), jnp.float32)    # (B, C2, m)

    # Conv2d 1x1 (no bias) + fresh eval-mode BatchNorm2d folded to (scale, shift).
    params = []
    wkeys = jax.random.split(k5, len(mlp) - 1)
    eps = 1e-5
    for i in range(1, len(mlp)):
        cin, cout = mlp[i - 1], mlp[i]
        w = jax.random.normal(wkeys[i - 1], (cout, cin), jnp.float32) * (2.0 / cin) ** 0.5
        gamma = jnp.ones((cout,), jnp.float32)
        beta = jnp.zeros((cout,), jnp.float32)
        running_mean = jnp.zeros((cout,), jnp.float32)
        running_var = jnp.ones((cout,), jnp.float32)
        scale = gamma / jnp.sqrt(running_var + eps)
        shift = beta - running_mean * scale
        params.append((w, scale, shift))

    # ---- test 1: full path (three_nn + three_interpolate + concat + MLP) ----
    out = jax.block_until_ready(
        pointnet_fp_forward(params, unknown, known, unknow_feats, known_feats))
    assert out.shape == (B, mlp[-1], n), out.shape
    ref = reference_forward(params, unknown, known, unknow_feats, known_feats)
    np.testing.assert_allclose(np.asarray(out), np.asarray(ref), rtol=2e-2, atol=2e-2)

    # ---- test 2: known is None (VMEM broadcast of (B, C2, 1) known_feats), no skip features ----
    C2b, cout_b = 8, 16
    kf_b = jax.random.normal(k6, (B, C2b, 1), jnp.float32)
    w_b = jax.random.normal(k7, (cout_b, C2b), jnp.float32) * (2.0 / C2b) ** 0.5
    params_b = [(w_b, jnp.ones((cout_b,), jnp.float32), jnp.zeros((cout_b,), jnp.float32))]
    out_b = jax.block_until_ready(pointnet_fp_forward(params_b, unknown, None, None, kf_b))
    assert out_b.shape == (B, cout_b, n), out_b.shape
    ref_b = reference_forward(params_b, unknown, None, None, kf_b)
    np.testing.assert_allclose(np.asarray(out_b), np.asarray(ref_b), rtol=2e-2, atol=2e-2)

    print("KERNEL_OK")
</pallas_src>

<mosaic_0001>
module attributes {stable_mosaic.version = 11 : i64} {
  func.func @kernel(%arg0: i32, %arg1: i32, %arg2: memref<1x16x256xbf16, #tpu.memory_space<vmem>>, %arg3: memref<1x16x16xbf16, #tpu.memory_space<vmem>>, %arg4: memref<1x1x256xf32, #tpu.memory_space<vmem>>, %arg5: memref<1x16x1xf32, #tpu.memory_space<vmem>>, %arg6: memref<1x8x16xbf16, #tpu.memory_space<vmem>>, %arg7: memref<1x4x256xf32, #tpu.memory_space<vmem>>, %arg8: memref<32x8xbf16, #tpu.memory_space<vmem>>, %arg9: memref<32x4xbf16, #tpu.memory_space<vmem>>, %arg10: memref<32x1xf32, #tpu.memory_space<vmem>>, %arg11: memref<16x32xbf16, #tpu.memory_space<vmem>>, %arg12: memref<16x1xf32, #tpu.memory_space<vmem>>, %arg13: memref<1x16x256xf32, #tpu.memory_space<vmem>>) attributes {dimension_semantics = [#tpu.dimension_semantics<parallel>, #tpu.dimension_semantics<parallel>], iteration_bounds = array<i64: 2, 2>, scalar_prefetch = 0 : i64, scratch_operands = 0 : i64, tpu.core_type = #tpu.core_type<tc>, window_params = [{transform_indices = @transform_0, window_bounds = array<i64: 1, 16, 256>}, {transform_indices = @transform_1, window_bounds = array<i64: 1, 16, 16>}, {transform_indices = @transform_2, window_bounds = array<i64: 1, 1, 256>}, {transform_indices = @transform_3, window_bounds = array<i64: 1, 16, 1>}, {transform_indices = @transform_4, window_bounds = array<i64: 1, 8, 16>}, {transform_indices = @transform_5, window_bounds = array<i64: 1, 4, 256>}, {pipeline_mode = #tpu.pipeline_mode<synchronous>, transform_indices = @transform_6, window_bounds = array<i64: 32, 8>}, {pipeline_mode = #tpu.pipeline_mode<synchronous>, transform_indices = @transform_7, window_bounds = array<i64: 32, 4>}, {pipeline_mode = #tpu.pipeline_mode<synchronous>, transform_indices = @transform_8, window_bounds = array<i64: 32, 1>}, {pipeline_mode = #tpu.pipeline_mode<synchronous>, transform_indices = @transform_9, window_bounds = array<i64: 16, 32>}, {pipeline_mode = #tpu.pipeline_mode<synchronous>, transform_indices = @transform_10, window_bounds = array<i64: 16, 1>}, {transform_indices = @transform_11, window_bounds = array<i64: 1, 16, 256>}]} {
    %c0 = arith.constant 0 : index
    %c0_0 = arith.constant 0 : index
    %c0_1 = arith.constant 0 : index
    %0 = vector.load %arg3[%c0, %c0_0, %c0_1] : memref<1x16x16xbf16, #tpu.memory_space<vmem>>, vector<1x16x16xbf16>
    %1 = vector.shape_cast %0 : vector<1x16x16xbf16> to vector<16x16xbf16>
    %c0_2 = arith.constant 0 : index
    %c0_3 = arith.constant 0 : index
    %c0_4 = arith.constant 0 : index
    %2 = vector.load %arg2[%c0_2, %c0_3, %c0_4] : memref<1x16x256xbf16, #tpu.memory_space<vmem>>, vector<1x16x256xbf16>
    %3 = vector.shape_cast %2 : vector<1x16x256xbf16> to vector<16x256xbf16>
    %cst = arith.constant dense<0.000000e+00> : vector<16x256xf32>
    %4 = tpu.matmul %1, %3, %cst {dimension_numbers = #tpu.dot_dimension_numbers<[1], [0], [0], [1], [0, 0, 1, 1], [], []>} : vector<16x16xbf16>, vector<16x256xbf16>, vector<16x256xf32> -> vector<16x256xf32>
    %c0_5 = arith.constant 0 : index
    %c0_6 = arith.constant 0 : index
    %c0_7 = arith.constant 0 : index
    %5 = vector.load %arg5[%c0_5, %c0_6, %c0_7] : memref<1x16x1xf32, #tpu.memory_space<vmem>>, vector<1x16x1xf32>
    %6 = vector.shape_cast %5 : vector<1x16x1xf32> to vector<16x1xf32>
    %c0_8 = arith.constant 0 : index
    %c0_9 = arith.constant 0 : index
    %c0_10 = arith.constant 0 : index
    %7 = vector.load %arg4[%c0_8, %c0_9, %c0_10] : memref<1x1x256xf32, #tpu.memory_space<vmem>>, vector<1x1x256xf32>
    %8 = vector.shape_cast %7 : vector<1x1x256xf32> to vector<1x256xf32>
    %9 = vector.broadcast %6 : vector<16x1xf32> to vector<16x256xf32>
    %10 = vector.broadcast %8 : vector<1x256xf32> to vector<16x256xf32>
    %11 = arith.addf %9, %10 : vector<16x256xf32>
    %cst_11 = arith.constant 2.000000e+00 : f32
    %12 = vector.broadcast %cst_11 : f32 to vector<16x256xf32>
    %13 = arith.mulf %12, %4 : vector<16x256xf32>
    %14 = arith.subf %11, %13 : vector<16x256xf32>
    %15 = tpu.iota {dimensions = array<i32: 0>} : vector<16x256xi32>
    %cst_12 = arith.constant dense<0x7F800000> : vector<256xf32>
    %16 = vector.multi_reduction <minimumf>, %14, %cst_12 [0] : vector<16x256xf32> to vector<256xf32>
    %17 = vector.shape_cast %16 : vector<256xf32> to vector<1x256xf32>
    %18 = vector.broadcast %17 : vector<1x256xf32> to vector<16x256xf32>
    %19 = arith.cmpf oeq, %14, %18 : vector<16x256xf32>
    %c16_i32 = arith.constant 16 : i32
    %20 = vector.broadcast %c16_i32 : i32 to vector<16x256xi32>
    %21 = arith.select %19, %15, %20 : vector<16x256xi1>, vector<16x256xi32>
    %cst_13 = arith.constant dense<2147483647> : vector<256xi32>
    %22 = vector.multi_reduction <minsi>, %21, %cst_13 [0] : vector<16x256xi32> to vector<256xi32>
    %23 = vector.shape_cast %22 : vector<256xi32> to vector<1x256xi32>
    %24 = vector.broadcast %23 : vector<1x256xi32> to vector<16x256xi32>
    %25 = arith.cmpi eq, %15, %24 : vector<16x256xi32>
    %cst_14 = arith.constant 1.000000e+30 : f32
    %26 = vector.broadcast %cst_14 : f32 to vector<16x256xf32>
    %27 = arith.select %25, %26, %14 : vector<16x256xi1>, vector<16x256xf32>
    %cst_15 = arith.constant dense<0x7F800000> : vector<256xf32>
    %28 = vector.multi_reduction <minimumf>, %27, %cst_15 [0] : vector<16x256xf32> to vector<256xf32>
    %29 = vector.shape_cast %28 : vector<256xf32> to vector<1x256xf32>
    %30 = vector.broadcast %29 : vector<1x256xf32> to vector<16x256xf32>
    %31 = arith.cmpf oeq, %27, %30 : vector<16x256xf32>
    %c16_i32_16 = arith.constant 16 : i32
    %32 = vector.broadcast %c16_i32_16 : i32 to vector<16x256xi32>
    %33 = arith.select %31, %15, %32 : vector<16x256xi1>, vector<16x256xi32>
    %cst_17 = arith.constant dense<2147483647> : vector<256xi32>
    %34 = vector.multi_reduction <minsi>, %33, %cst_17 [0] : vector<16x256xi32> to vector<256xi32>
    %35 = vector.shape_cast %34 : vector<256xi32> to vector<1x256xi32>
    %36 = vector.broadcast %35 : vector<1x256xi32> to vector<16x256xi32>
    %37 = arith.cmpi eq, %15, %36 : vector<16x256xi32>
    %cst_18 = arith.constant 1.000000e+30 : f32
    %38 = vector.broadcast %cst_18 : f32 to vector<16x256xf32>
    %39 = arith.select %37, %38, %27 : vector<16x256xi1>, vector<16x256xf32>
    %cst_19 = arith.constant dense<0x7F800000> : vector<256xf32>
    %40 = vector.multi_reduction <minimumf>, %39, %cst_19 [0] : vector<16x256xf32> to vector<256xf32>
    %41 = vector.shape_cast %40 : vector<256xf32> to vector<1x256xf32>
    %42 = vector.broadcast %41 : vector<1x256xf32> to vector<16x256xf32>
    %43 = arith.cmpf oeq, %39, %42 : vector<16x256xf32>
    %c16_i32_20 = arith.constant 16 : i32
    %44 = vector.broadcast %c16_i32_20 : i32 to vector<16x256xi32>
    %45 = arith.select %43, %15, %44 : vector<16x256xi1>, vector<16x256xi32>
    %cst_21 = arith.constant dense<2147483647> : vector<256xi32>
    %46 = vector.multi_reduction <minsi>, %45, %cst_21 [0] : vector<16x256xi32> to vector<256xi32>
    %47 = vector.shape_cast %46 : vector<256xi32> to vector<1x256xi32>
    %48 = vector.broadcast %47 : vector<1x256xi32> to vector<16x256xi32>
    %49 = arith.cmpi eq, %15, %48 : vector<16x256xi32>
    %cst_22 = arith.constant 0.000000e+00 : f32
    %50 = vector.broadcast %cst_22 : f32 to vector<1x256xf32>
    %51 = arith.maximumf %17, %50 : vector<1x256xf32>
    %cst_23 = arith.constant 9.99999993E-9 : f32
    %52 = vector.broadcast %cst_23 : f32 to vector<1x256xf32>
    %53 = arith.addf %51, %52 : vector<1x256xf32>
    %54 = tpu.reciprocal %53 {approx = true} : vector<1x256xf32> -> vector<1x256xf32>
    %cst_24 = arith.constant 0.000000e+00 : f32
    %55 = vector.broadcast %cst_24 : f32 to vector<1x256xf32>
    %56 = arith.maximumf %29, %55 : vector<1x256xf32>
    %cst_25 = arith.constant 9.99999993E-9 : f32
    %57 = vector.broadcast %cst_25 : f32 to vector<1x256xf32>
    %58 = arith.addf %56, %57 : vector<1x256xf32>
    %59 = tpu.reciprocal %58 {approx = true} : vector<1x256xf32> -> vector<1x256xf32>
    %cst_26 = arith.constant 0.000000e+00 : f32
    %60 = vector.broadcast %cst_26 : f32 to vector<1x256xf32>
    %61 = arith.maximumf %41, %60 : vector<1x256xf32>
    %cst_27 = arith.constant 9.99999993E-9 : f32
    %62 = vector.broadcast %cst_27 : f32 to vector<1x256xf32>
    %63 = arith.addf %61, %62 : vector<1x256xf32>
    %64 = tpu.reciprocal %63 {approx = true} : vector<1x256xf32> -> vector<1x256xf32>
    %65 = arith.addf %54, %59 : vector<1x256xf32>
    %66 = arith.addf %65, %64 : vector<1x256xf32>
    %67 = tpu.reciprocal %66 {approx = true} : vector<1x256xf32> -> vector<1x256xf32>
    %68 = arith.mulf %54, %67 : vector<1x256xf32>
    %69 = arith.mulf %59, %67 : vector<1x256xf32>
    %70 = arith.mulf %64, %67 : vector<1x256xf32>
    %cst_28 = arith.constant 0.000000e+00 : f32
    %71 = vector.shape_cast %70 : vector<1x256xf32> to vector<1x256xf32>
    %72 = vector.broadcast %71 : vector<1x256xf32> to vector<16x256xf32>
    %73 = vector.broadcast %cst_28 : f32 to vector<16x256xf32>
    %74 = arith.select %49, %72, %73 : vector<16x256xi1>, vector<16x256xf32>
    %75 = vector.shape_cast %69 : vector<1x256xf32> to vector<1x256xf32>
    %76 = vector.broadcast %75 : vector<1x256xf32> to vector<16x256xf32>
    %77 = arith.select %37, %76, %74 : vector<16x256xi1>, vector<16x256xf32>
    %78 = vector.shape_cast %68 : vector<1x256xf32> to vector<1x256xf32>
    %79 = vector.broadcast %78 : vector<1x256xf32> to vector<16x256xf32>
    %80 = arith.select %25, %79, %77 : vector<16x256xi1>, vector<16x256xf32>
    %c0_29 = arith.constant 0 : index
    %c0_30 = arith.constant 0 : index
    %c0_31 = arith.constant 0 : index
    %81 = vector.load %arg6[%c0_29, %c0_30, %c0_31] : memref<1x8x16xbf16, #tpu.memory_space<vmem>>, vector<1x8x16xbf16>
    %82 = vector.shape_cast %81 : vector<1x8x16xbf16> to vector<8x16xbf16>
    %83 = arith.truncf %80 : vector<16x256xf32> to vector<16x256xbf16>
    %cst_32 = arith.constant dense<0.000000e+00> : vector<8x256xf32>
    %84 = tpu.matmul %82, %83, %cst_32 {dimension_numbers = #tpu.dot_dimension_numbers<[1], [0], [0], [1], [0, 0, 1, 1], [], []>} : vector<8x16xbf16>, vector<16x256xbf16>, vector<8x256xf32> -> vector<8x256xf32>
    %c0_33 = arith.constant 0 : index
    %c0_34 = arith.constant 0 : index
    %85 = vector.load %arg8[%c0_33, %c0_34] : memref<32x8xbf16, #tpu.memory_space<vmem>>, vector<32x8xbf16>
    %86 = arith.truncf %84 : vector<8x256xf32> to vector<8x256xbf16>
    %cst_35 = arith.constant dense<0.000000e+00> : vector<32x256xf32>
    %87 = tpu.matmul %85, %86, %cst_35 {dimension_numbers = #tpu.dot_dimension_numbers<[1], [0], [0], [1], [0, 0, 1, 1], [], []>} : vector<32x8xbf16>, vector<8x256xbf16>, vector<32x256xf32> -> vector<32x256xf32>
    %c0_36 = arith.constant 0 : index
    %c0_37 = arith.constant 0 : index
    %88 = vector.load %arg9[%c0_36, %c0_37] : memref<32x4xbf16, #tpu.memory_space<vmem>>, vector<32x4xbf16>
    %c0_38 = arith.constant 0 : index
    %c0_39 = arith.constant 0 : index
    %c0_40 = arith.constant 0 : index
    %89 = vector.load %arg7[%c0_38, %c0_39, %c0_40] : memref<1x4x256xf32, #tpu.memory_space<vmem>>, vector<1x4x256xf32>
    %90 = vector.shape_cast %89 : vector<1x4x256xf32> to vector<4x256xf32>
    %91 = arith.truncf %90 : vector<4x256xf32> to vector<4x256xbf16>
    %cst_41 = arith.constant dense<0.000000e+00> : vector<32x256xf32>
    %92 = tpu.matmul %88, %91, %cst_41 {dimension_numbers = #tpu.dot_dimension_numbers<[1], [0], [0], [1], [0, 0, 1, 1], [], []>} : vector<32x4xbf16>, vector<4x256xbf16>, vector<32x256xf32> -> vector<32x256xf32>
    %93 = arith.addf %87, %92 : vector<32x256xf32>
    %c0_42 = arith.constant 0 : index
    %c0_43 = arith.constant 0 : index
    %94 = vector.load %arg10[%c0_42, %c0_43] : memref<32x1xf32, #tpu.memory_space<vmem>>, vector<32x1xf32>
    %95 = vector.broadcast %94 : vector<32x1xf32> to vector<32x256xf32>
    %96 = arith.addf %93, %95 : vector<32x256xf32>
    %cst_44 = arith.constant 0.000000e+00 : f32
    %97 = vector.broadcast %cst_44 : f32 to vector<32x256xf32>
    %98 = arith.maximumf %96, %97 : vector<32x256xf32>
    %c0_45 = arith.constant 0 : index
    %c0_46 = arith.constant 0 : index
    %99 = vector.load %arg11[%c0_45, %c0_46] : memref<16x32xbf16, #tpu.memory_space<vmem>>, vector<16x32xbf16>
    %100 = arith.truncf %98 : vector<32x256xf32> to vector<32x256xbf16>
    %cst_47 = arith.constant dense<0.000000e+00> : vector<16x256xf32>
    %101 = tpu.matmul %99, %100, %cst_47 {dimension_numbers = #tpu.dot_dimension_numbers<[1], [0], [0], [1], [0, 0, 1, 1], [], []>} : vector<16x32xbf16>, vector<32x256xbf16>, vector<16x256xf32> -> vector<16x256xf32>
    %c0_48 = arith.constant 0 : index
    %c0_49 = arith.constant 0 : index
    %102 = vector.load %arg12[%c0_48, %c0_49] : memref<16x1xf32, #tpu.memory_space<vmem>>, vector<16x1xf32>
    %103 = vector.broadcast %102 : vector<16x1xf32> to vector<16x256xf32>
    %104 = arith.addf %101, %103 : vector<16x256xf32>
    %cst_50 = arith.constant 0.000000e+00 : f32
    %105 = vector.broadcast %cst_50 : f32 to vector<16x256xf32>
    %106 = arith.maximumf %104, %105 : vector<16x256xf32>
    %c0_51 = arith.constant 0 : index
    %c0_52 = arith.constant 0 : index
    %c0_53 = arith.constant 0 : index
    %107 = vector.load %arg13[%c0_51, %c0_52, %c0_53] : memref<1x16x256xf32, #tpu.memory_space<vmem>>, vector<1x16x256xf32>
    %108 = vector.shape_cast %107 : vector<1x16x256xf32> to vector<16x256xf32>
    %109 = vector.shape_cast %106 : vector<16x256xf32> to vector<1x16x256xf32>
    tpu.vector_store %arg13[%c0_51, %c0_52, %c0_53], %109 {strides = array<i32>} : memref<1x16x256xf32, #tpu.memory_space<vmem>>, vector<1x16x256xf32>,
    return
  }
  func.func @transform_0(%arg0: i32, %arg1: i32) -> (i32, i32, i32) {
    %c0_i32 = arith.constant 0 : i32
    %c0_i32_0 = arith.constant 0 : i32
    return %arg0, %c0_i32, %arg1 : i32, i32, i32
  }
  func.func @transform_1(%arg0: i32, %arg1: i32) -> (i32, i32, i32) {
    %c0_i32 = arith.constant 0 : i32
    %c0_i32_0 = arith.constant 0 : i32
    %c0_i32_1 = arith.constant 0 : i32
    return %arg0, %c0_i32, %c0_i32_0 : i32, i32, i32
  }
  func.func @transform_2(%arg0: i32, %arg1: i32) -> (i32, i32, i32) {
    %c0_i32 = arith.constant 0 : i32
    %c0_i32_0 = arith.constant 0 : i32
    return %arg0, %c0_i32, %arg1 : i32, i32, i32
  }
  func.func @transform_3(%arg0: i32, %arg1: i32) -> (i32, i32, i32) {
    %c0_i32 = arith.constant 0 : i32
    %c0_i32_0 = arith.constant 0 : i32
    %c0_i32_1 = arith.constant 0 : i32
    return %arg0, %c0_i32, %c0_i32_0 : i32, i32, i32
  }
  func.func @transform_4(%arg0: i32, %arg1: i32) -> (i32, i32, i32) {
    %c0_i32 = arith.constant 0 : i32
    %c0_i32_0 = arith.constant 0 : i32
    %c0_i32_1 = arith.constant 0 : i32
    return %arg0, %c0_i32, %c0_i32_0 : i32, i32, i32
  }
  func.func @transform_5(%arg0: i32, %arg1: i32) -> (i32, i32, i32) {
    %c0_i32 = arith.constant 0 : i32
    %c0_i32_0 = arith.constant 0 : i32
    return %arg0, %c0_i32, %arg1 : i32, i32, i32
  }
  func.func @transform_6(%arg0: i32, %arg1: i32) -> (i32, i32) {
    %c0_i32 = arith.constant 0 : i32
    %c0_i32_0 = arith.constant 0 : i32
    %c0_i32_1 = arith.constant 0 : i32
    return %c0_i32, %c0_i32_0 : i32, i32
  }
  func.func @transform_7(%arg0: i32, %arg1: i32) -> (i32, i32) {
    %c0_i32 = arith.constant 0 : i32
    %c0_i32_0 = arith.constant 0 : i32
    %c0_i32_1 = arith.constant 0 : i32
    return %c0_i32, %c0_i32_0 : i32, i32
  }
  func.func @transform_8(%arg0: i32, %arg1: i32) -> (i32, i32) {
    %c0_i32 = arith.constant 0 : i32
    %c0_i32_0 = arith.constant 0 : i32
    %c0_i32_1 = arith.constant 0 : i32
    return %c0_i32, %c0_i32_0 : i32, i32
  }
  func.func @transform_9(%arg0: i32, %arg1: i32) -> (i32, i32) {
    %c0_i32 = arith.constant 0 : i32
    %c0_i32_0 = arith.constant 0 : i32
    %c0_i32_1 = arith.constant 0 : i32
    return %c0_i32, %c0_i32_0 : i32, i32
  }
  func.func @transform_10(%arg0: i32, %arg1: i32) -> (i32, i32) {
    %c0_i32 = arith.constant 0 : i32
    %c0_i32_0 = arith.constant 0 : i32
    %c0_i32_1 = arith.constant 0 : i32
    return %c0_i32, %c0_i32_0 : i32, i32
  }
  func.func @transform_11(%arg0: i32, %arg1: i32) -> (i32, i32, i32) {
    %c0_i32 = arith.constant 0 : i32
    %c0_i32_0 = arith.constant 0 : i32
    return %arg0, %c0_i32, %arg1 : i32, i32, i32
  }
}

</mosaic_0001>

<llo_original>
// kernel: tpu_custom_call.1
$region0: #{tpu_custom_call.1}
  #allocation0 [shape = 'u32[]', space=smem, size = 0x4, offset = 0x4, fixed_abs, tag = 'smem constant byte address 0x4 - core index']
  #allocation1 [shape = 'u32[144,128]{1,0:T(1,128)}', space=vmem, size = 0x12000, scoped, tag = 'internal scratch']
  %s0 = inlined_call_operand.vmem [shape: bf16[2,16,512], index: 0, kind: input, shape index: {}]
  %s1 = inlined_call_operand.vmem [shape: bf16[2,16,16], index: 1, kind: input, shape index: {}]
  %s2 = inlined_call_operand.vmem [shape: f32[2,1,512], index: 2, kind: input, shape index: {}]
  %s3 = inlined_call_operand.vmem [shape: f32[2,16,1], index: 3, kind: input, shape index: {}]
  %s4 = inlined_call_operand.vmem [shape: bf16[2,8,16], index: 4, kind: input, shape index: {}]
  %s5 = inlined_call_operand.vmem [shape: f32[2,4,512], index: 5, kind: input, shape index: {}]
  %s6 = inlined_call_operand.vmem [shape: bf16[32,8], index: 6, kind: input, shape index: {}]
  %s7 = inlined_call_operand.vmem [shape: bf16[32,4], index: 7, kind: input, shape index: {}]
  %s8 = inlined_call_operand.vmem [shape: f32[32,1], index: 8, kind: input, shape index: {}]
  %s9 = inlined_call_operand.vmem [shape: bf16[16,32], index: 9, kind: input, shape index: {}]
  %s10 = inlined_call_operand.vmem [shape: f32[16,1], index: 10, kind: input, shape index: {}]
  %s11 = inlined_call_operand.hbm [shape: f32[2,16,512], index: 11, kind: output, shape index: {}]
  %s12 = sld [smem:[#allocation0]]
  $region115: #{tpu_custom_call.1} parent=0
    _
  %s14 = ssub.s32 1, %s12
  %s15 = scalar_select 0, %s14, %s12
  $region1: #{tpu_custom_call.1} parent=0
    #allocation2 [shape = 'u8[16384]{0}', space=vmem, size = 0x4000, scoped, tag = 'input window, operand 0']
    #allocation3 [shape = 'u8[32768]{0}', space=vmem, size = 0x8000, scoped, tag = 'output window, operand 0']
    #allocation4 [shape = 's32[2]{0}', space=sflag, size = 0x8, scoped, tag = 'scoped memory for tpu_custom_call.1']
    %16 = vsyncpa [#allocation4], 0
    %s17 = scalar_lea.sflag [#allocation4], 1
    %18 = vsyncpa %s17, 0
    loop: start=0, step=1, limit=6
    $region2: #{tpu_custom_call.1} parent=1 // loop_pre_header
      _
    $region3: #{tpu_custom_call.1} parent=1 // loop_header
      %s20 = sphi 0, %s24
      %p21 = scmp.ge.s32.totalorder %s20, 6
      %s27 = sphi 0, %s39
      %s28 = sphi 0, %s35
      %s29 = sphi 0, %s27
      %s30 = sphi 0, %s28
      %s31 = sphi 0, %s29
      %s32 = sphi 0, %s30
      %s44 = sphi 0, %s46
      %s47 = sphi 0, %s44
      %s48 = sphi 0, %s47
      %s64 = sphi 0, %s48
      %s70 = sphi 0, %s72
      %s73 = sphi 0, %s70
      %s74 = sphi 0, %s73
      %s90 = sphi 0, %s74
      %s98 = sphi 0, %s100
      %s101 = sphi 0, %s98
      %s102 = sphi 0, %s101
      %s118 = sphi 0, %s102
      %s124 = sphi 0, %s126
      %s127 = sphi 0, %s124
      %s128 = sphi 0, %s127
      %s144 = sphi 0, %s128
      %s150 = sphi 0, %s152
      %s153 = sphi 0, %s150
      %s154 = sphi 0, %s153
      %s170 = sphi 0, %s154
      %s178 = sphi 0, %s180
      %s181 = sphi 0, %s178
      %s182 = sphi 0, %s181
      %s198 = sphi 0, %s182
      %s202 = sphi 0, %s202
      %s204 = sphi 0, %s202
      %s205 = sphi 0, %s204
      %s219 = sphi 0, %s205
      %s223 = sphi 0, %s223
      %s225 = sphi 0, %s223
      %s226 = sphi 0, %s225
      %s240 = sphi 0, %s226
      %s244 = sphi 0, %s244
      %s246 = sphi 0, %s244
      %s247 = sphi 0, %s246
      %s261 = sphi 0, %s247
      %s265 = sphi 0, %s265
      %s267 = sphi 0, %s265
      %s268 = sphi 0, %s267
      %s282 = sphi 0, %s268
      %s286 = sphi 0, %s286
      %s288 = sphi 0, %s286
      %s289 = sphi 0, %s288
      %s303 = sphi 0, %s289
      %s311 = sphi 0, %s313
      %s314 = sphi 0, %s311
      %s315 = sphi 0, %s314
      %s331 = sphi 0, %s315
    $region4: #{tpu_custom_call.1} parent=1 // loop_header_branch
      %23 = sbr.rel (%p21) target = $region8
    $region5: #{tpu_custom_call.1} parent=1 // loop_body
      %s25 = ssub.s32 %s20, 1
      %s26 = ssub.s32 %s20, 2
      %s33 = sadd.s32 1, %s28
      %p34 = scmp.ge.s32.totalorder %s33, 2
      %s35 = scalar_select %p34, 0, %s33
      %s36 = sadd.s32 1, %s27
      %s37 = scalar_select %p34, %s36, %s27
      %p38 = scmp.ge.s32.totalorder %s37, 2
      %s39 = scalar_select %p38, 0, %s37
      %s40 = ssub.s32 %s27, %s39
      %s41 = ssub.s32 %s28, %s35
      %s42 = sor.u32 %s40, %s41
      %p43 = scmp.eq.s32.totalorder %s42, 0
      %s45 = sadd.s32 %s44, 1
      %s46 = scalar_select %p43, %s44, %s45
      %p49 = pneg %p43
      %p50 = scmp.eq.s32.totalorder %s20, 3
      %p51 = por %p49, %p50
      %p52 = scmp.ne.s32.totalorder %s44, %s47
      %p53 = scmp.eq.s32.totalorder %s20, 0
      %p54 = por %p52, %p53
      %p55 = scmp.ne.s32.totalorder %s44, %s47
      %p56 = scmp.eq.s32.totalorder %s25, 3
      %p57 = por %p55, %p56
      %p58 = scmp.ne.s32.totalorder %s47, %s48
      %p59 = scmp.eq.s32.totalorder %s25, 0
      %p60 = por %p58, %p59
      %p61 = scmp.ne.s32.totalorder %s47, %s48
      %p62 = scmp.eq.s32.totalorder %s26, 3
      %p63 = por %p61, %p62
      %p65 = scmp.ne.s32.totalorder %s48, %s64
      %p66 = scmp.eq.s32.totalorder %s26, 0
      %p67 = por %p65, %p66
      %s68 = ssub.s32 %s27, %s39
      %p69 = scmp.eq.s32.totalorder %s68, 0
      %s71 = sadd.s32 %s70, 1
      %s72 = scalar_select %p69, %s70, %s71
      %p75 = pneg %p69
      %p76 = scmp.eq.s32.totalorder %s20, 3
      %p77 = por %p75, %p76
      %p78 = scmp.ne.s32.totalorder %s70, %s73
      %p79 = scmp.eq.s32.totalorder %s20, 0
      %p80 = por %p78, %p79
      %p81 = scmp.ne.s32.totalorder %s70, %s73
      %p82 = scmp.eq.s32.totalorder %s25, 3
      %p83 = por %p81, %p82
      %p84 = scmp.ne.s32.totalorder %s73, %s74
      %p85 = scmp.eq.s32.totalorder %s25, 0
      %p86 = por %p84, %p85
      %p87 = scmp.ne.s32.totalorder %s73, %s74
      %p88 = scmp.eq.s32.totalorder %s26, 3
      %p89 = por %p87, %p88
      %p91 = scmp.ne.s32.totalorder %s74, %s90
      %p92 = scmp.eq.s32.totalorder %s26, 0
      %p93 = por %p91, %p92
      %s94 = ssub.s32 %s27, %s39
      %s95 = ssub.s32 %s28, %s35
      %s96 = sor.u32 %s94, %s95
      %p97 = scmp.eq.s32.totalorder %s96, 0
      %s99 = sadd.s32 %s98, 1
      %s100 = scalar_select %p97, %s98, %s99
      %p103 = pneg %p97
      %p104 = scmp.eq.s32.totalorder %s20, 3
      %p105 = por %p103, %p104
      %p106 = scmp.ne.s32.totalorder %s98, %s101
      %p107 = scmp.eq.s32.totalorder %s20, 0
      %p108 = por %p106, %p107
      %p109 = scmp.ne.s32.totalorder %s98, %s101
      %p110 = scmp.eq.s32.totalorder %s25, 3
      %p111 = por %p109, %p110
      %p112 = scmp.ne.s32.totalorder %s101, %s102
      %p113 = scmp.eq.s32.totalorder %s25, 0
      %p114 = por %p112, %p113
      %p115 = scmp.ne.s32.totalorder %s101, %s102
      %p116 = scmp.eq.s32.totalorder %s26, 3
      %p117 = por %p115, %p116
      %p119 = scmp.ne.s32.totalorder %s102, %s118
      %p120 = scmp.eq.s32.totalorder %s26, 0
      %p121 = por %p119, %p120
      %s122 = ssub.s32 %s27, %s39
      %p123 = scmp.eq.s32.totalorder %s122, 0
      %s125 = sadd.s32 %s124, 1
      %s126 = scalar_select %p123, %s124, %s125
      %p129 = pneg %p123
      %p130 = scmp.eq.s32.totalorder %s20, 3
      %p131 = por %p129, %p130
      %p132 = scmp.ne.s32.totalorder %s124, %s127
      %p133 = scmp.eq.s32.totalorder %s20, 0
      %p134 = por %p132, %p133
      %p135 = scmp.ne.s32.totalorder %s124, %s127
      %p136 = scmp.eq.s32.totalorder %s25, 3
      %p137 = por %p135, %p136
      %p138 = scmp.ne.s32.totalorder %s127, %s128
      %p139 = scmp.eq.s32.totalorder %s25, 0
      %p140 = por %p138, %p139
      %p141 = scmp.ne.s32.totalorder %s127, %s128
      %p142 = scmp.eq.s32.totalorder %s26, 3
      %p143 = por %p141, %p142
      %p145 = scmp.ne.s32.totalorder %s128, %s144
      %p146 = scmp.eq.s32.totalorder %s26, 0
      %p147 = por %p145, %p146
      %s148 = ssub.s32 %s27, %s39
      %p149 = scmp.eq.s32.totalorder %s148, 0
      %s151 = sadd.s32 %s150, 1
      %s152 = scalar_select %p149, %s150, %s151
      %p155 = pneg %p149
      %p156 = scmp.eq.s32.totalorder %s20, 3
      %p157 = por %p155, %p156
      %p158 = scmp.ne.s32.totalorder %s150, %s153
      %p159 = scmp.eq.s32.totalorder %s20, 0
      %p160 = por %p158, %p159
      %p161 = scmp.ne.s32.totalorder %s150, %s153
      %p162 = scmp.eq.s32.totalorder %s25, 3
      %p163 = por %p161, %p162
      %p164 = scmp.ne.s32.totalorder %s153, %s154
      %p165 = scmp.eq.s32.totalorder %s25, 0
      %p166 = por %p164, %p165
      %p167 = scmp.ne.s32.totalorder %s153, %s154
      %p168 = scmp.eq.s32.totalorder %s26, 3
      %p169 = por %p167, %p168
      %p171 = scmp.ne.s32.totalorder %s154, %s170
      %p172 = scmp.eq.s32.totalorder %s26, 0
      %p173 = por %p171, %p172
      %s174 = ssub.s32 %s27, %s39
      %s175 = ssub.s32 %s28, %s35
      %s176 = sor.u32 %s174, %s175
      %p177 = scmp.eq.s32.totalorder %s176, 0
      %s179 = sadd.s32 %s178, 1
      %s180 = scalar_select %p177, %s178, %s179
      %p183 = pneg %p177
      %p184 = scmp.eq.s32.totalorder %s20, 3
      %p185 = por %p183, %p184
      %p186 = scmp.ne.s32.totalorder %s178, %s181
      %p187 = scmp.eq.s32.totalorder %s20, 0
      %p188 = por %p186, %p187
      %p189 = scmp.ne.s32.totalorder %s178, %s181
      %p190 = scmp.eq.s32.totalorder %s25, 3
      %p191 = por %p189, %p190
      %p192 = scmp.ne.s32.totalorder %s181, %s182
      %p193 = scmp.eq.s32.totalorder %s25, 0
      %p194 = por %p192, %p193
      %p195 = scmp.ne.s32.totalorder %s181, %s182
      %p196 = scmp.eq.s32.totalorder %s26, 3
      %p197 = por %p195, %p196
      %p199 = scmp.ne.s32.totalorder %s182, %s198
      %p200 = scmp.eq.s32.totalorder %s26, 0
      %p201 = por %p199, %p200
      %s203 = sadd.s32 %s202, 1
      %p206 = scmp.eq.s32.totalorder %s20, 3
      %p207 = scmp.ne.s32.totalorder %s202, %s204
      %p208 = scmp.eq.s32.totalorder %s20, 0
      %p209 = por %p207, %p208
      %p210 = scmp.ne.s32.totalorder %s202, %s204
      %p211 = scmp.eq.s32.totalorder %s25, 3
      %p212 = por %p210, %p211
      %p213 = scmp.ne.s32.totalorder %s204, %s205
      %p214 = scmp.eq.s32.totalorder %s25, 0
      %p215 = por %p213, %p214
      %p216 = scmp.ne.s32.totalorder %s204, %s205
      %p217 = scmp.eq.s32.totalorder %s26, 3
      %p218 = por %p216, %p217
      %p220 = scmp.ne.s32.totalorder %s205, %s219
      %p221 = scmp.eq.s32.totalorder %s26, 0
      %p222 = por %p220, %p221
      %s224 = sadd.s32 %s223, 1
      %p227 = scmp.eq.s32.totalorder %s20, 3
      %p228 = scmp.ne.s32.totalorder %s223, %s225
      %p229 = scmp.eq.s32.totalorder %s20, 0
      %p230 = por %p228, %p229
      %p231 = scmp.ne.s32.totalorder %s223, %s225
      %p232 = scmp.eq.s32.totalorder %s25, 3
      %p233 = por %p231, %p232
      %p234 = scmp.ne.s32.totalorder %s225, %s226
      %p235 = scmp.eq.s32.totalorder %s25, 0
      %p236 = por %p234, %p235
      %p237 = scmp.ne.s32.totalorder %s225, %s226
      %p238 = scmp.eq.s32.totalorder %s26, 3
      %p239 = por %p237, %p238
      %p241 = scmp.ne.s32.totalorder %s226, %s240
      %p242 = scmp.eq.s32.totalorder %s26, 0
      %p243 = por %p241, %p242
      %s245 = sadd.s32 %s244, 1
      %p248 = scmp.eq.s32.totalorder %s20, 3
      %p249 = scmp.ne.s32.totalorder %s244, %s246
      %p250 = scmp.eq.s32.totalorder %s20, 0
      %p251 = por %p249, %p250
      %p252 = scmp.ne.s32.totalorder %s244, %s246
      %p253 = scmp.eq.s32.totalorder %s25, 3
      %p254 = por %p252, %p253
      %p255 = scmp.ne.s32.totalorder %s246, %s247
      %p256 = scmp.eq.s32.totalorder %s25, 0
      %p257 = por %p255, %p256
      %p258 = scmp.ne.s32.totalorder %s246, %s247
      %p259 = scmp.eq.s32.totalorder %s26, 3
      %p260 = por %p258, %p259
      %p262 = scmp.ne.s32.totalorder %s247, %s261
      %p263 = scmp.eq.s32.totalorder %s26, 0
      %p264 = por %p262, %p263
      %s266 = sadd.s32 %s265, 1
      %p269 = scmp.eq.s32.totalorder %s20, 3
      %p270 = scmp.ne.s32.totalorder %s265, %s267
      %p271 = scmp.eq.s32.totalorder %s20, 0
      %p272 = por %p270, %p271
      %p273 = scmp.ne.s32.totalorder %s265, %s267
      %p274 = scmp.eq.s32.totalorder %s25, 3
      %p275 = por %p273, %p274
      %p276 = scmp.ne.s32.totalorder %s267, %s268
      %p277 = scmp.eq.s32.totalorder %s25, 0
      %p278 = por %p276, %p277
      %p279 = scmp.ne.s32.totalorder %s267, %s268
      %p280 = scmp.eq.s32.totalorder %s26, 3
      %p281 = por %p279, %p280
      %p283 = scmp.ne.s32.totalorder %s268, %s282
      %p284 = scmp.eq.s32.totalorder %s26, 0
      %p285 = por %p283, %p284
      %s287 = sadd.s32 %s286, 1
      %p290 = scmp.eq.s32.totalorder %s20, 3
      %p291 = scmp.ne.s32.totalorder %s286, %s288
      %p292 = scmp.eq.s32.totalorder %s20, 0
      %p293 = por %p291, %p292
      %p294 = scmp.ne.s32.totalorder %s286, %s288
      %p295 = scmp.eq.s32.totalorder %s25, 3
      %p296 = por %p294, %p295
      %p297 = scmp.ne.s32.totalorder %s288, %s289
      %p298 = scmp.eq.s32.totalorder %s25, 0
      %p299 = por %p297, %p298
      %p300 = scmp.ne.s32.totalorder %s288, %s289
      %p301 = scmp.eq.s32.totalorder %s26, 3
      %p302 = por %p300, %p301
      %p304 = scmp.ne.s32.totalorder %s289, %s303
      %p305 = scmp.eq.s32.totalorder %s26, 0
      %p306 = por %p304, %p305
      %s307 = ssub.s32 %s27, %s39
      %s308 = ssub.s32 %s28, %s35
      %s309 = sor.u32 %s307, %s308
      %p310 = scmp.eq.s32.totalorder %s309, 0
      %s312 = sadd.s32 %s311, 1
      %s313 = scalar_select %p310, %s311, %s312
      %p316 = pneg %p310
      %p317 = scmp.eq.s32.totalorder %s20, 3
      %p318 = por %p316, %p317
      %p319 = scmp.ne.s32.totalorder %s311, %s314
      %p320 = scmp.eq.s32.totalorder %s20, 0
      %p321 = por %p319, %p320
      %p322 = scmp.ne.s32.totalorder %s311, %s314
      %p323 = scmp.eq.s32.totalorder %s25, 3
      %p324 = por %p322, %p323
      %p325 = scmp.ne.s32.totalorder %s314, %s315
      %p326 = scmp.eq.s32.totalorder %s25, 0
      %p327 = por %p325, %p326
      %p328 = scmp.ne.s32.totalorder %s314, %s315
      %p329 = scmp.eq.s32.totalorder %s26, 3
      %p330 = por %p328, %p329
      %p332 = scmp.ne.s32.totalorder %s315, %s331
      %p333 = scmp.eq.s32.totalorder %s26, 0
      %p334 = por %p332, %p333
      %p335 = scmp.le.s32.totalorder 1, %s20
      %p336 = scmp.lt.s32.totalorder %s20, 5
      %p337 = pnand %p335, %p336
      %p338 = pneg %p337
      // Predicated region
      $region9: #{tpu_custom_call.1} parent=5 // pred_check
        _
      $region10: #{tpu_custom_call.1} parent=5 // pred_check_branch
        %340 = sbr.rel (%p337) target = $region12
      $region11: #{tpu_custom_call.1} parent=5 // pred_region
        %s341 = ssub.s32 %s20, 1
        // Predicated region
        $region13: #{tpu_custom_call.1} parent=11 // pred_check
          %p342 = pneg %p215
        $region14: #{tpu_custom_call.1} parent=11 // pred_check_branch
          %344 = sbr.rel (%p342) target = $region16
        $region15: #{tpu_custom_call.1} parent=11 // pred_region
          _
        $region16: #{tpu_custom_call.1} parent=11 // pred_fallthru
          _
        // Predicated region
        $region17: #{tpu_custom_call.1} parent=11 // pred_check
          %p345 = pneg %p236
        $region18: #{tpu_custom_call.1} parent=11 // pred_check_branch
          %347 = sbr.rel (%p345) target = $region20
        $region19: #{tpu_custom_call.1} parent=11 // pred_region
          _
        $region20: #{tpu_custom_call.1} parent=11 // pred_fallthru
          _
        // Predicated region
        $region21: #{tpu_custom_call.1} parent=11 // pred_check
          %p348 = pneg %p257
        $region22: #{tpu_custom_call.1} parent=11 // pred_check_branch
          %350 = sbr.rel (%p348) target = $region24
        $region23: #{tpu_custom_call.1} parent=11 // pred_region
          _
        $region24: #{tpu_custom_call.1} parent=11 // pred_fallthru
          _
        // Predicated region
        $region25: #{tpu_custom_call.1} parent=11 // pred_check
          %p351 = pneg %p278
        $region26: #{tpu_custom_call.1} parent=11 // pred_check_branch
          %353 = sbr.rel (%p351) target = $region28
        $region27: #{tpu_custom_call.1} parent=11 // pred_region
          _
        $region28: #{tpu_custom_call.1} parent=11 // pred_fallthru
          _
        // Predicated region
        $region29: #{tpu_custom_call.1} parent=11 // pred_check
          %p354 = pneg %p299
        $region30: #{tpu_custom_call.1} parent=11 // pred_check_branch
          %356 = sbr.rel (%p354) target = $region32
        $region31: #{tpu_custom_call.1} parent=11 // pred_region
          _
        $region32: #{tpu_custom_call.1} parent=11 // pred_fallthru
          _
      $region12: #{tpu_custom_call.1} parent=5 // pred_fallthru
        _
      %p357 = scmp.lt.s32.totalorder %s20, 4
      // Predicated region
      $region33: #{tpu_custom_call.1} parent=5 // pred_check
        %p358 = pneg %p357
      $region34: #{tpu_custom_call.1} parent=5 // pred_check_branch
        %360 = sbr.rel (%p358) target = $region36
      $region35: #{tpu_custom_call.1} parent=5 // pred_region
        // Predicated region
        $region37: #{tpu_custom_call.1} parent=35 // pred_check
          %p361 = pneg %p54
        $region38: #{tpu_custom_call.1} parent=35 // pred_check_branch
          %363 = sbr.rel (%p361) target = $region40
        $region39: #{tpu_custom_call.1} parent=35 // pred_region
          %s364 = sand.u32 %s44, 1
          %s365 = sand.u32 %s44, 1
          %s366 = smul.addr %s365, 16
          %s367 = scalar_lea.vmem [#allocation2], %s366
          %s368 = smul.u32 2, %s28
          %s369 = smul.addr %s27, 8
          %s370 = sadd.s32 %s368, %s369
          %s371 = smul.addr %s370, 4
          %s372 = scalar_lea.vmem %s0, %s371
          // Predicated region
          $region41: #{tpu_custom_call.1} parent=39 // pred_check
            _
          $region42: #{tpu_custom_call.1} parent=39 // pred_check_branch
            %374 = sbr.rel (0) target = $region44
          $region43: #{tpu_custom_call.1} parent=39 // pred_region
            // Predicated region
            $region45: #{tpu_custom_call.1} parent=43 // pred_check
              _
            $region46: #{tpu_custom_call.1} parent=43 // pred_check_branch
              %376 = sbr.rel (0) target = $region48
            $region47: #{tpu_custom_call.1} parent=43 // pred_region
              // Predicated region
              $region60: #{tpu_custom_call.1} parent=47 // pred_check
                _
              $region61: #{tpu_custom_call.1} parent=47 // pred_check_branch
                %394 = sbr.rel (0) target = $region63
              $region62: #{tpu_custom_call.1} parent=47 // pred_region
                loop: start=0, step=1, limit=1
                $region64: #{tpu_custom_call.1} parent=62 // loop_pre_header
                  _
                $region65: #{tpu_custom_call.1} parent=62 // loop_header
                  %s396 = sphi 0, %s400
                  %p397 = scmp.ge.s32.totalorder %s396, 1
                  %s401 = sphi %s372, %s372
                  %s402 = sphi %s367, %s367
                $region66: #{tpu_custom_call.1} parent=62 // loop_header_branch
                  %399 = sbr.rel (%p397) target = $region70
                $region67: #{tpu_custom_call.1} parent=62 // loop_body
                  %v403 = vld [vmem:[%s401] sm:$0xff]
                  %404 = vst [vmem:[%s402] sm:$0xff] %v403
                  %v405 = vld [vmem:[%s401 + $0x10] sm:$0xff]
                  %406 = vst [vmem:[%s402 + $0x8] sm:$0xff] %v405
                $region68: #{tpu_custom_call.1} parent=62 // loop_footer
                  %s400 = sadd.s32 1, %s396
                $region69: #{tpu_custom_call.1} parent=62 // loop_footer_branch
                  %395 = sbr.rel target = $region65
                $region70: #{tpu_custom_call.1} parent=62 // loop_exit
                  _
              $region63: #{tpu_custom_call.1} parent=47 // pred_fallthru
                _
              // Predicated region
              $region71: #{tpu_custom_call.1} parent=47 // pred_check
                _
              $region72: #{tpu_custom_call.1} parent=47 // pred_check_branch
                %408 = sbr.rel target = $region74
              $region73: #{tpu_custom_call.1} parent=47 // pred_region
                _
              $region74: #{tpu_custom_call.1} parent=47 // pred_fallthru
                _
            $region48: #{tpu_custom_call.1} parent=43 // pred_fallthru
              _
            // Predicated region
            $region49: #{tpu_custom_call.1} parent=43 // pred_check
              _
            $region50: #{tpu_custom_call.1} parent=43 // pred_check_branch
              %378 = sbr.rel target = $region52
            $region51: #{tpu_custom_call.1} parent=43 // pred_region
              %s380 = ssub.s32 256, 1
              loop: start=0, step=1, limit=1
              $region53: #{tpu_custom_call.1} parent=51 // loop_pre_header
                _
              $region54: #{tpu_custom_call.1} parent=51 // loop_header
                %s382 = sphi 0, %s386
                %p383 = scmp.ge.s32.totalorder %s382, 1
                %s387 = sphi %s372, %s372
                %s388 = sphi %s367, %s367
              $region55: #{tpu_custom_call.1} parent=51 // loop_header_branch
                %385 = sbr.rel (%p383) target = $region59
              $region56: #{tpu_custom_call.1} parent=51 // loop_body
                %v389 = vld [vmem:[%s387] sm:%s380]
                %390 = vst [vmem:[%s388] sm:%s380] %v389
                %v391 = vld [vmem:[%s387 + $0x10] sm:%s380]
                %392 = vst [vmem:[%s388 + $0x8] sm:%s380] %v391
              $region57: #{tpu_custom_call.1} parent=51 // loop_footer
                %s386 = sadd.s32 1, %s382
              $region58: #{tpu_custom_call.1} parent=51 // loop_footer_branch
                %381 = sbr.rel target = $region54
              $region59: #{tpu_custom_call.1} parent=51 // loop_exit
                _
            $region52: #{tpu_custom_call.1} parent=43 // pred_fallthru
              _
          $region44: #{tpu_custom_call.1} parent=39 // pred_fallthru
            _
          %409 = vnop
        $region40: #{tpu_custom_call.1} parent=35 // pred_fallthru
          _
        // Predicated region
        $region75: #{tpu_custom_call.1} parent=35 // pred_check
          %p410 = pneg %p80
        $region76: #{tpu_custom_call.1} parent=35 // pred_check_branch
          %412 = sbr.rel (%p410) target = $region78
        $region77: #{tpu_custom_call.1} parent=35 // pred_region
          %p413 = scmp.lt.s32.totalorder %s27, 1
          %s414 = scalar_select %p413, %s27, 1
          %s415 = smul.addr %s414, 2
          %s416 = smul.addr %s415, 4
          %s417 = scalar_lea.vmem %s1, %s416
        $region78: #{tpu_custom_call.1} parent=35 // pred_fallthru
          _
        // Predicated region
        $region79: #{tpu_custom_call.1} parent=35 // pred_check
          %p418 = pneg %p108
        $region80: #{tpu_custom_call.1} parent=35 // pred_check_branch
          %420 = sbr.rel (%p418) target = $region82
        $region81: #{tpu_custom_call.1} parent=35 // pred_region
          %s421 = smul.u32 2, %s28
          %p422 = scmp.lt.s32.totalorder %s27, 1
          %s423 = scalar_select %p422, %s27, 1
          %p424 = scmp.lt.s32.totalorder %s421, 3
          %s425 = scalar_select %p424, %s421, 3
          %s426 = smul.addr %s423, 4
          %s427 = sadd.s32 %s425, %s426
          %s428 = scalar_lea.vmem %s2, %s427
          %s429 = smul.u32 2, %s28
        $region82: #{tpu_custom_call.1} parent=35 // pred_fallthru
          _
        // Predicated region
        $region83: #{tpu_custom_call.1} parent=35 // pred_check
          %p430 = pneg %p134
        $region84: #{tpu_custom_call.1} parent=35 // pred_check_branch
          %432 = sbr.rel (%p430) target = $region86
        $region85: #{tpu_custom_call.1} parent=35 // pred_region
          %p433 = scmp.lt.s32.totalorder %s27, 1
          %s434 = scalar_select %p433, %s27, 1
          %s435 = smul.addr %s434, 2
          %s436 = smul.addr %s435, 8
          %s437 = scalar_lea.vmem %s3, %s436
        $region86: #{tpu_custom_call.1} parent=35 // pred_fallthru
          _
        // Predicated region
        $region87: #{tpu_custom_call.1} parent=35 // pred_check
          %p438 = pneg %p160
        $region88: #{tpu_custom_call.1} parent=35 // pred_check_branch
          %440 = sbr.rel (%p438) target = $region90
        $region89: #{tpu_custom_call.1} parent=35 // pred_region
          %p441 = scmp.lt.s32.totalorder %s27, 1
          %s442 = scalar_select %p441, %s27, 1
          %s443 = smul.addr %s442, 4
          %s444 = scalar_lea.vmem %s4, %s443
        $region90: #{tpu_custom_call.1} parent=35 // pred_fallthru
          _
        // Predicated region
        $region91: #{tpu_custom_call.1} parent=35 // pred_check
          %p445 = pneg %p188
        $region92: #{tpu_custom_call.1} parent=35 // pred_check_branch
          %447 = sbr.rel (%p445) target = $region94
        $region93: #{tpu_custom_call.1} parent=35 // pred_region
          %s448 = smul.u32 2, %s28
          %p449 = scmp.lt.s32.totalorder %s27, 1
          %s450 = scalar_select %p449, %s27, 1
          %p451 = scmp.lt.s32.totalorder %s448, 3
          %s452 = scalar_select %p451, %s448, 3
          %s453 = smul.addr %s450, 4
          %s454 = sadd.s32 %s452, %s453
          %s455 = smul.addr %s454, 4
          %s456 = scalar_lea.vmem %s5, %s455
          %s457 = smul.u32 2, %s28
        $region94: #{tpu_custom_call.1} parent=35 // pred_fallthru
          _
      $region36: #{tpu_custom_call.1} parent=5 // pred_fallthru
        _
      %p458 = scmp.le.s32.totalorder 1, %s20
      %p459 = scmp.lt.s32.totalorder %s20, 5
      %p460 = pnand %p458, %p459
      %p461 = pneg %p460
      // Predicated region
      $region95: #{tpu_custom_call.1} parent=5 // pred_check
        _
      $region96: #{tpu_custom_call.1} parent=5 // pred_check_branch
        %463 = sbr.rel (%p460) target = $region98
      $region97: #{tpu_custom_call.1} parent=5 // pred_region
        %s464 = ssub.s32 %s20, 1
        %s465 = sand.u32 %s47, 1
        %s466 = sand.u32 %s47, 1
        %s467 = smul.addr %s466, 16
        %s468 = scalar_lea.vmem [#allocation2], %s467
        // Predicated region
        $region99: #{tpu_custom_call.1} parent=97 // pred_check
          %p469 = pneg %p60
        $region100: #{tpu_custom_call.1} parent=97 // pred_check_branch
          %471 = sbr.rel (%p469) target = $region102
        $region101: #{tpu_custom_call.1} parent=97 // pred_region
          _
        $region102: #{tpu_custom_call.1} parent=97 // pred_fallthru
          _
        %s472 = sand.u32 %s47, 1
        %s473 = sand.u32 %s47, 1
        %s474 = smul.addr %s473, 16
        %s475 = scalar_lea.vmem [#allocation2], %s474
        %p476 = pneg %p60
        %p477 = pneg %p57
        %p478 = scmp.lt.s32.totalorder %s29, 1
        %s479 = scalar_select %p478, %s29, 1
        %s480 = smul.addr %s479, 2
        %s481 = smul.addr %s480, 4
        %s482 = scalar_lea.vmem %s1, %s481
        %p483 = pneg %p86
        %p484 = pneg %p83
        %s485 = smul.u32 2, %s30
        %p486 = scmp.lt.s32.totalorder %s29, 1
        %s487 = scalar_select %p486, %s29, 1
        %p488 = scmp.lt.s32.totalorder %s485, 3
        %s489 = scalar_select %p488, %s485, 3
        %s490 = smul.addr %s487, 4
        %s491 = sadd.s32 %s489, %s490
        %s492 = scalar_lea.vmem %s2, %s491
        %p493 = pneg %p114
        %p494 = pneg %p111
        %p495 = scmp.lt.s32.totalorder %s29, 1
        %s496 = scalar_select %p495, %s29, 1
        %s497 = smul.addr %s496, 2
        %s498 = smul.addr %s497, 8
        %s499 = scalar_lea.vmem %s3, %s498
        %p500 = pneg %p140
        %p501 = pneg %p137
        %p502 = scmp.lt.s32.totalorder %s29, 1
        %s503 = scalar_select %p502, %s29, 1
        %s504 = smul.addr %s503, 4
        %s505 = scalar_lea.vmem %s4, %s504
        %p506 = pneg %p166
        %p507 = pneg %p163
        %s508 = smul.u32 2, %s30
        %p509 = scmp.lt.s32.totalorder %s29, 1
        %s510 = scalar_select %p509, %s29, 1
        %p511 = scmp.lt.s32.totalorder %s508, 3
        %s512 = scalar_select %p511, %s508, 3
        %s513 = smul.addr %s510, 4
        %s514 = sadd.s32 %s512, %s513
        %s515 = smul.addr %s514, 4
        %s516 = scalar_lea.vmem %s5, %s515
        %p517 = pneg %p194
        %p518 = pneg %p191
        %p519 = pneg %p215
        %p520 = pneg %p212
        %p521 = pneg %p236
        %p522 = pneg %p233
        %p523 = pneg %p257
        %p524 = pneg %p254
        %p525 = pneg %p278
        %p526 = pneg %p275
        %p527 = pneg %p299
        %p528 = pneg %p296
        %p529 = pneg %p327
        %p530 = pneg %p324
        %s531 = sand.u32 %s314, 1
        %s532 = scalar_lea.sflag [#allocation4], %s531
        %s533 = sand.u32 %s314, 1
        %s534 = smul.addr %s533, 32
        %s535 = scalar_lea.vmem [#allocation3], %s534
        %s536 = smul.u32 2, %s30
        %p537 = scmp.lt.s32.totalorder %s29, 1
        %s538 = scalar_select %p537, %s29, 1
        %s539 = smul.addr %s538, 2
        %s540 = smul.addr %s539, 4
        %s541 = scalar_lea.vmem %s1, %s540
        %s542 = smul.u32 2, %s30
        %p543 = scmp.lt.s32.totalorder %s29, 1
        %s544 = scalar_select %p543, %s29, 1
        %p545 = scmp.lt.s32.totalorder %s542, 3
        %s546 = scalar_select %p545, %s542, 3
        %s547 = smul.addr %s544, 4
        %s548 = sadd.s32 %s546, %s547
        %s549 = scalar_lea.vmem %s2, %s548
        %s550 = smul.u32 2, %s30
        %p551 = scmp.lt.s32.totalorder %s29, 1
        %s552 = scalar_select %p551, %s29, 1
        %s553 = smul.addr %s552, 2
        %s554 = smul.addr %s553, 8
        %s555 = scalar_lea.vmem %s3, %s554
        %p556 = scmp.lt.s32.totalorder %s29, 1
        %s557 = scalar_select %p556, %s29, 1
        %s558 = smul.addr %s557, 4
        %s559 = scalar_lea.vmem %s4, %s558
        %s560 = smul.u32 2, %s30
        %p561 = scmp.lt.s32.totalorder %s29, 1
        %s562 = scalar_select %p561, %s29, 1
        %p563 = scmp.lt.s32.totalorder %s560, 3
        %s564 = scalar_select %p563, %s560, 3
        %s565 = smul.addr %s562, 4
        %s566 = sadd.s32 %s564, %s565
        %s567 = smul.addr %s566, 4
        %s568 = scalar_lea.vmem %s5, %s567
        %s569 = smul.u32 2, %s30
        %s570 = smul.u32 2, %s30
        %v572 = vld [vmem:[%s541] sm:$0xf]
        %v573 = vld [vmem:[%s541 + $0x4] sm:$0xf]
        %v574 = vld [vmem:[%s468] sm:$0xff]
        %v575 = vld [vmem:[%s468 + $0x8] sm:$0xff]
        %v578 = vunpack.c.l.b16 %v572
        %v579 = vunpack.c.l.b16 %v573
        %v580 = vpack.c.b16 %v579, %v578
        %v583 = vunpack.c.l.b16 %v574
        %v584 = vunpack.c.h.b16 %v574
        %v585 = vunpack.c.l.b16 %v575
        %v586 = vunpack.c.h.b16 %v575
        %v587 = vpack.c.b16 %v585, %v583
        %v588 = vpack.c.b16 %v586, %v584
        %vm591 = vcmask 130048
        %v593 = vsel %vm591, %v580, 0
        %595 = vmatprep.subr.bf16.mxu0 0
        %596 = vmatpush1.bf16.msra.mxu0 0
        %597 = vmatprep.subr.bf16.mxu0 0
        %598 = vmatpush1.bf16.msra.mxu0 0
        %599 = vmatprep.subr.bf16.mxu0 0
        %600 = vmatpush1.bf16.msra.mxu0 0
        %601 = vmatprep.subr.bf16.mxu0 0
        %602 = vmatpush1.bf16.msra.mxu0 0
        %603 = vmatprep.subr.bf16.mxu0 0
        %604 = vmatpush1.bf16.msra.mxu0 0
        %605 = vmatprep.subr.bf16.mxu0 0
        %606 = vmatpush1.bf16.msra.mxu0 0
        %607 = vmatprep.subr.bf16.mxu0 0
        %608 = vmatpush1.bf16.msra.mxu0 0
        %609 = vmatprep.subr.bf16.mxu0 %v588
        %610 = vmatpush1.bf16.msra.mxu0 %v587
        %611 = vmatprep.subr.bf16.mxu0 0
        %612 = vmatpush2.bf16.msra.mxu0 0
        %613 = vmatprep.subr.bf16.mxu0 0
        %614 = vmatpush2.bf16.msra.mxu0 0
        %615 = vmatprep.subr.bf16.mxu0 0
        %616 = vmatpush2.bf16.msra.mxu0 0
        %617 = vmatprep.subr.bf16.mxu0 0
        %618 = vmatpush2.bf16.msra.mxu0 0
        %619 = vmatprep.subr.bf16.mxu0 0
        %620 = vmatpush2.bf16.msra.mxu0 0
        %621 = vmatprep.subr.bf16.mxu0 0
        %622 = vmatpush2.bf16.msra.mxu0 0
        %623 = vmatprep.subr.bf16.mxu0 0
        %624 = vmatpush2.bf16.msra.mxu0 0
        %625 = vmatprep.subr.bf16.mxu0 0
        %626 = vmatpush2.bf16.msra.mxu0 0
        %627 = vmatprep.mubr.bf16.mxu0 0
        %628 = vmatmul.mubr.bf16.gmra.mxu0 %v593
        %v629 = vpop.f32.mrf.mxu0
        %v630 = vadd.f32 0.0, %v629
        %v631 = vpop.f32.mrf.mxu0
        %v632 = vadd.f32 0.0, %v631
        %v633 = vpop.f32.mrf.mxu0
        %v634 = vadd.f32 0.0, %v633
        %v635 = vpop.f32.mrf.mxu0
        %v636 = vadd.f32 0.0, %v635
        %637 = vdwg.mxu0
        %v638 = vld [vmem:[%s555] sm:$0xff]
        %v639 = vld [vmem:[%s555 + $0x8] sm:$0xff]
        %v640 = vld [vmem:[%s549] sm:$0x3]
        %642 = vset.pattern.permute.xlu0 0
        %643 = vperm.xlu0 %642, %v638
        %v644 = vpop.permute.xlu0 %643
        %647 = vset.pattern.permute.xlu0 0
        %648 = vperm.xlu0 %647, %v639
        %v649 = vpop.permute.xlu0 %648
        %v652 = vlaneseq
        %v653 = vshrl.u32 %v652, 7
        %v654 = vsub.s32 0, %v653
        %v655 = vrot.slane %v640, %v654
        %v656 = vlaneseq
        %v657 = vshrl.u32 %v656, 7
        %v658 = vsub.s32 1, %v657
        %v659 = vrot.slane %v640, %v658
        %v662 = vadd.f32 %v644, %v655
        %v663 = vadd.f32 %v644, %v659
        %v664 = vadd.f32 %v649, %v655
        %v665 = vadd.f32 %v649, %v659
        %v666 = vmul.f32 %v630, 2.0
        %v667 = vmul.f32 %v632, 2.0
        %v668 = vmul.f32 %v634, 2.0
        %v669 = vmul.f32 %v636, 2.0
        %v670 = vsub.f32 %v662, %v666
        %v671 = vsub.f32 %v663, %v667
        %v672 = vsub.f32 %v664, %v668
        %v673 = vsub.f32 %v665, %v669
        %v674 = vlaneseq
        %v675 = vshrl.u32 %v674, 7
        %v676 = vadd.s32 %v675, 8
        %v677 = vmin.f32 %v670, %v672
        %v678 = vrot.slane %v677, 4
        %v679 = vmin.f32 %v677, %v678
        %v680 = vrot.slane %v679, 2
        %v681 = vmin.f32 %v679, %v680
        %v682 = vrot.slane %v681, 1
        %v683 = vmin.f32 %v681, %v682
        %v684 = vmin.f32 %v671, %v673
        %v685 = vrot.slane %v684, 4
        %v686 = vmin.f32 %v684, %v685
        %v687 = vrot.slane %v686, 2
        %v688 = vmin.f32 %v686, %v687
        %v689 = vrot.slane %v688, 1
        %v690 = vmin.f32 %v688, %v689
        %vm691 = vcmp.eq.f32.partialorder %v670, %v683
        %vm692 = vcmp.eq.f32.partialorder %v671, %v690
        %vm693 = vcmp.eq.f32.partialorder %v672, %v683
        %vm694 = vcmp.eq.f32.partialorder %v673, %v690
        %v695 = vsel %vm691, %v675, 16
        %v696 = vsel %vm692, %v675, 16
        %v697 = vsel %vm693, %v676, 16
        %v698 = vsel %vm694, %v676, 16
        %vm699 = vcmp.lt.s32.totalorder %v695, %v697
        %v700 = vsel %vm699, %v695, %v697
        %v701 = vrot.slane %v700, 4
        %vm702 = vcmp.lt.s32.totalorder %v700, %v701
        %v703 = vsel %vm702, %v700, %v701
        %v704 = vrot.slane %v703, 2
        %vm705 = vcmp.lt.s32.totalorder %v703, %v704
        %v706 = vsel %vm705, %v703, %v704
        %v707 = vrot.slane %v706, 1
        %vm708 = vcmp.lt.s32.totalorder %v706, %v707
        %v709 = vsel %vm708, %v706, %v707
        %vm710 = vcmp.lt.s32.totalorder %v696, %v698
        %v711 = vsel %vm710, %v696, %v698
        %v712 = vrot.slane %v711, 4
        %vm713 = vcmp.lt.s32.totalorder %v711, %v712
        %v714 = vsel %vm713, %v711, %v712
        %v715 = vrot.slane %v714, 2
        %vm716 = vcmp.lt.s32.totalorder %v714, %v715
        %v717 = vsel %vm716, %v714, %v715
        %v718 = vrot.slane %v717, 1
        %vm719 = vcmp.lt.s32.totalorder %v717, %v718
        %v720 = vsel %vm719, %v717, %v718
        %vm721 = vcmp.eq.s32.totalorder %v675, %v709
        %vm722 = vcmp.eq.s32.totalorder %v675, %v720
        %vm723 = vcmp.eq.s32.totalorder %v676, %v709
        %vm724 = vcmp.eq.s32.totalorder %v676, %v720
        %v725 = vsel %vm721, 1e+30, %v670
        %v726 = vsel %vm722, 1e+30, %v671
        %v727 = vsel %vm723, 1e+30, %v672
        %v728 = vsel %vm724, 1e+30, %v673
        %v729 = vmin.f32 %v725, %v727
        %v730 = vrot.slane %v729, 4
        %v731 = vmin.f32 %v729, %v730
        %v732 = vrot.slane %v731, 2
        %v733 = vmin.f32 %v731, %v732
        %v734 = vrot.slane %v733, 1
        %v735 = vmin.f32 %v733, %v734
        %v736 = vmin.f32 %v726, %v728
        %v737 = vrot.slane %v736, 4
        %v738 = vmin.f32 %v736, %v737
        %v739 = vrot.slane %v738, 2
        %v740 = vmin.f32 %v738, %v739
        %v741 = vrot.slane %v740, 1
        %v742 = vmin.f32 %v740, %v741
        %vm743 = vcmp.eq.f32.partialorder %v725, %v735
        %vm744 = vcmp.eq.f32.partialorder %v726, %v742
        %vm745 = vcmp.eq.f32.partialorder %v727, %v735
        %vm746 = vcmp.eq.f32.partialorder %v728, %v742
        %v747 = vsel %vm743, %v675, 16
        %v748 = vsel %vm744, %v675, 16
        %v749 = vsel %vm745, %v676, 16
        %v750 = vsel %vm746, %v676, 16
        %vm751 = vcmp.lt.s32.totalorder %v747, %v749
        %v752 = vsel %vm751, %v747, %v749
        %v753 = vrot.slane %v752, 4
        %vm754 = vcmp.lt.s32.totalorder %v752, %v753
        %v755 = vsel %vm754, %v752, %v753
        %v756 = vrot.slane %v755, 2
        %vm757 = vcmp.lt.s32.totalorder %v755, %v756
        %v758 = vsel %vm757, %v755, %v756
        %v759 = vrot.slane %v758, 1
        %vm760 = vcmp.lt.s32.totalorder %v758, %v759
        %v761 = vsel %vm760, %v758, %v759
        %vm762 = vcmp.lt.s32.totalorder %v748, %v750
        %v763 = vsel %vm762, %v748, %v750
        %v764 = vrot.slane %v763, 4
        %vm765 = vcmp.lt.s32.totalorder %v763, %v764
        %v766 = vsel %vm765, %v763, %v764
        %v767 = vrot.slane %v766, 2
        %vm768 = vcmp.lt.s32.totalorder %v766, %v767
        %v769 = vsel %vm768, %v766, %v767
        %v770 = vrot.slane %v769, 1
        %vm771 = vcmp.lt.s32.totalorder %v769, %v770
        %v772 = vsel %vm771, %v769, %v770
        %vm773 = vcmp.eq.s32.totalorder %v675, %v761
        %vm774 = vcmp.eq.s32.totalorder %v675, %v772
        %vm775 = vcmp.eq.s32.totalorder %v676, %v761
        %vm776 = vcmp.eq.s32.totalorder %v676, %v772
        %v777 = vsel %vm773, 1e+30, %v725
        %v778 = vsel %vm774, 1e+30, %v726
        %v779 = vsel %vm775, 1e+30, %v727
        %v780 = vsel %vm776, 1e+30, %v728
        %v781 = vmin.f32 %v777, %v779
        %v782 = vrot.slane %v781, 4
        %v783 = vmin.f32 %v781, %v782
        %v784 = vrot.slane %v783, 2
        %v785 = vmin.f32 %v783, %v784
        %v786 = vrot.slane %v785, 1
        %v787 = vmin.f32 %v785, %v786
        %v788 = vmin.f32 %v778, %v780
        %v789 = vrot.slane %v788, 4
        %v790 = vmin.f32 %v788, %v789
        %v791 = vrot.slane %v790, 2
        %v792 = vmin.f32 %v790, %v791
        %v793 = vrot.slane %v792, 1
        %v794 = vmin.f32 %v792, %v793
        %vm795 = vcmp.eq.f32.partialorder %v777, %v787
        %vm796 = vcmp.eq.f32.partialorder %v778, %v794
        %vm797 = vcmp.eq.f32.partialorder %v779, %v787
        %vm798 = vcmp.eq.f32.partialorder %v780, %v794
        %v799 = vsel %vm795, %v675, 16
        %v800 = vsel %vm796, %v675, 16
        %v801 = vsel %vm797, %v676, 16
        %v802 = vsel %vm798, %v676, 16
        %vm803 = vcmp.lt.s32.totalorder %v799, %v801
        %v804 = vsel %vm803, %v799, %v801
        %v805 = vrot.slane %v804, 4
        %vm806 = vcmp.lt.s32.totalorder %v804, %v805
        %v807 = vsel %vm806, %v804, %v805
        %v808 = vrot.slane %v807, 2
        %vm809 = vcmp.lt.s32.totalorder %v807, %v808
        %v810 = vsel %vm809, %v807, %v808
        %v811 = vrot.slane %v810, 1
        %vm812 = vcmp.lt.s32.totalorder %v810, %v811
        %v813 = vsel %vm812, %v810, %v811
        %vm814 = vcmp.lt.s32.totalorder %v800, %v802
        %v815 = vsel %vm814, %v800, %v802
        %v816 = vrot.slane %v815, 4
        %vm817 = vcmp.lt.s32.totalorder %v815, %v816
        %v818 = vsel %vm817, %v815, %v816
        %v819 = vrot.slane %v818, 2
        %vm820 = vcmp.lt.s32.totalorder %v818, %v819
        %v821 = vsel %vm820, %v818, %v819
        %v822 = vrot.slane %v821, 1
        %vm823 = vcmp.lt.s32.totalorder %v821, %v822
        %v824 = vsel %vm823, %v821, %v822
        %vm825 = vcmp.eq.s32.totalorder %v675, %v813
        %vm826 = vcmp.eq.s32.totalorder %v675, %v824
        %vm827 = vcmp.eq.s32.totalorder %v676, %v813
        %vm828 = vcmp.eq.s32.totalorder %v676, %v824
        %v829 = vmax.f32 %v683, 0.0
        %v830 = vmax.f32 %v690, 0.0
        %v831 = vadd.f32 %v829, 1e-08
        %v832 = vadd.f32 %v830, 1e-08
        %v833 = vrcp.pop %v831
        %v834 = vrcp.pop %v832
        %v835 = vmax.f32 %v735, 0.0
        %v836 = vmax.f32 %v742, 0.0
        %v837 = vadd.f32 %v835, 1e-08
        %v838 = vadd.f32 %v836, 1e-08
        %v839 = vrcp.pop %v837
        %v840 = vrcp.pop %v838
        %v841 = vmax.f32 %v787, 0.0
        %v842 = vmax.f32 %v794, 0.0
        %v843 = vadd.f32 %v841, 1e-08
        %v844 = vadd.f32 %v842, 1e-08
        %v845 = vrcp.pop %v843
        %v846 = vrcp.pop %v844
        %v847 = vadd.f32 %v833, %v839
        %v848 = vadd.f32 %v834, %v840
        %v849 = vadd.f32 %v847, %v845
        %v850 = vadd.f32 %v848, %v846
        %v851 = vrcp.pop %v849
        %v852 = vrcp.pop %v850
        %v853 = vmul.f32 %v833, %v851
        %v854 = vmul.f32 %v834, %v852
        %v855 = vmul.f32 %v839, %v851
        %v856 = vmul.f32 %v840, %v852
        %v857 = vmul.f32 %v845, %v851
        %v858 = vmul.f32 %v846, %v852
        %v859 = vsel %vm825, %v857, 0.0
        %v860 = vsel %vm826, %v858, 0.0
        %v861 = vsel %vm827, %v857, 0.0
        %v862 = vsel %vm828, %v858, 0.0
        %v863 = vsel %vm773, %v855, %v859
        %v864 = vsel %vm774, %v856, %v860
        %v865 = vsel %vm775, %v855, %v861
        %v866 = vsel %vm776, %v856, %v862
        %v867 = vsel %vm721, %v853, %v863
        %v868 = vsel %vm722, %v854, %v864
        %v869 = vsel %vm723, %v853, %v865
        %v870 = vsel %vm724, %v854, %v866
        %v871 = vld [vmem:[%s559] sm:$0xf]
        %v872 = vpack.c.bf16 %v869, %v867
        %v873 = vpack.c.bf16 %v870, %v868
        %v875 = vsel %vm591, %v871, 0
        %877 = vmatprep.subr.bf16.mxu0 0
        %878 = vmatpush1.bf16.msra.mxu0 0
        %879 = vmatprep.subr.bf16.mxu0 0
        %880 = vmatpush1.bf16.msra.mxu0 0
        %881 = vmatprep.subr.bf16.mxu0 0
        %882 = vmatpush1.bf16.msra.mxu0 0
        %883 = vmatprep.subr.bf16.mxu0 0
        %884 = vmatpush1.bf16.msra.mxu0 0
        %885 = vmatprep.subr.bf16.mxu0 0
        %886 = vmatpush1.bf16.msra.mxu0 0
        %887 = vmatprep.subr.bf16.mxu0 0
        %888 = vmatpush1.bf16.msra.mxu0 0
        %889 = vmatprep.subr.bf16.mxu0 0
        %890 = vmatpush1.bf16.msra.mxu0 0
        %891 = vmatprep.subr.bf16.mxu0 %v873
        %892 = vmatpush1.bf16.msra.mxu0 %v872
        %893 = vmatprep.subr.bf16.mxu0 0
        %894 = vmatpush2.bf16.msra.mxu0 0
        %895 = vmatprep.subr.bf16.mxu0 0
        %896 = vmatpush2.bf16.msra.mxu0 0
        %897 = vmatprep.subr.bf16.mxu0 0
        %898 = vmatpush2.bf16.msra.mxu0 0
        %899 = vmatprep.subr.bf16.mxu0 0
        %900 = vmatpush2.bf16.msra.mxu0 0
        %901 = vmatprep.subr.bf16.mxu0 0
        %902 = vmatpush2.bf16.msra.mxu0 0
        %903 = vmatprep.subr.bf16.mxu0 0
        %904 = vmatpush2.bf16.msra.mxu0 0
        %905 = vmatprep.subr.bf16.mxu0 0
        %906 = vmatpush2.bf16.msra.mxu0 0
        %907 = vmatprep.subr.bf16.mxu0 0
        %908 = vmatpush2.bf16.msra.mxu0 0
        %909 = vmatprep.mubr.bf16.mxu0 0
        %910 = vmatmul.mubr.bf16.gmra.mxu0 %v875
        %v911 = vpop.f32.mrf.mxu0
        %v912 = vadd.f32 0.0, %v911
        %v913 = vpop.f32.mrf.mxu0
        %v914 = vadd.f32 0.0, %v913
        %v915 = vpop.f32.mrf.mxu0
        %v916 = vpop.f32.mrf.mxu0
        %917 = vdwg.mxu0
        %v918 = vld [vmem:[%s6] sm:$0xf]
        %v919 = vld [vmem:[%s6 + $0x4] sm:$0xf]
        %v920 = vld [vmem:[%s6 + $0x8] sm:$0xf]
        %v921 = vld [vmem:[%s6 + $0xc] sm:$0xf]
        %v922 = vpack.c.bf16 %v912, %v912
        %v923 = vpack.c.bf16 %v914, %v914
        %v924 = vld [vmem:[%s7] sm:$0xf]
        %v925 = vld [vmem:[%s7 + $0x4] sm:$0xf]
        %v926 = vld [vmem:[%s7 + $0x8] sm:$0xf]
        %v927 = vld [vmem:[%s7 + $0xc] sm:$0xf]
        %v928 = vld [vmem:[%s568] sm:$0xff]
        %v930 = vcombine.high %v928, %v928
        %v932 = vpack.c.bf16 %v928, %v928
        %v933 = vpack.c.bf16 %v930, %v930
        %v938 = vunpack.c.l.b16 %v924
        %v939 = vunpack.c.l.b16 %v925
        %v940 = vunpack.c.l.b16 %v926
        %v941 = vunpack.c.l.b16 %v927
        %v942 = vpack.c.b16 %v939, %v938
        %v943 = vpack.c.b16 %v941, %v940
        %vm944 = vcmask 31744
        %v946 = vsel %vm944, %v942, 0
        %v949 = vsel %vm944, %v943, 0
        %vm951 = vcmask 1041408
        %v953 = vsel %vm951, %v932, 0
        %v956 = vsel %vm951, %v933, 0
        %958 = vmatprep.subr.bf16.mxu0 0
        %959 = vmatpush1.bf16.msra.mxu0 0
        %960 = vmatprep.subr.bf16.mxu0 0
        %961 = vmatpush1.bf16.msra.mxu0 0
        %962 = vmatprep.subr.bf16.mxu0 0
        %963 = vmatpush1.bf16.msra.mxu0 0
        %964 = vmatprep.subr.bf16.mxu0 0
        %965 = vmatpush1.bf16.msra.mxu0 0
        %966 = vmatprep.subr.bf16.mxu0 0
        %967 = vmatpush1.bf16.msra.mxu0 0
        %968 = vmatprep.subr.bf16.mxu0 0
        %969 = vmatpush1.bf16.msra.mxu0 0
        %970 = vmatprep.subr.bf16.mxu0 0
        %971 = vmatpush1.bf16.msra.mxu0 0
        %972 = vmatprep.subr.bf16.mxu0 %v956
        %973 = vmatpush1.bf16.msra.mxu0 %v953
        %974 = vmatprep.subr.bf16.mxu0 0
        %975 = vmatpush2.bf16.msra.mxu0 0
        %976 = vmatprep.subr.bf16.mxu0 0
        %977 = vmatpush2.bf16.msra.mxu0 0
        %978 = vmatprep.subr.bf16.mxu0 0
        %979 = vmatpush2.bf16.msra.mxu0 0
        %980 = vmatprep.subr.bf16.mxu0 0
        %981 = vmatpush2.bf16.msra.mxu0 0
        %982 = vmatprep.subr.bf16.mxu0 0
        %983 = vmatpush2.bf16.msra.mxu0 0
        %984 = vmatprep.subr.bf16.mxu0 0
        %985 = vmatpush2.bf16.msra.mxu0 0
        %986 = vmatprep.subr.bf16.mxu0 0
        %987 = vmatpush2.bf16.msra.mxu0 0
        %988 = vmatprep.subr.bf16.mxu0 0
        %989 = vmatpush2.bf16.msra.mxu0 0
        %990 = vmatprep.mubr.bf16.mxu0 0
        %991 = vmatmul.mubr.bf16.gmra.mxu0 %v946
        %v992 = vpop.f32.mrf.mxu0
        %v993 = vadd.f32 0.0, %v992
        %v994 = vpop.f32.mrf.mxu0
        %v995 = vadd.f32 0.0, %v994
        %v996 = vpop.f32.mrf.mxu0
        %v997 = vadd.f32 0.0, %v996
        %v998 = vpop.f32.mrf.mxu0
        %v999 = vadd.f32 0.0, %v998
        %1000 = vmatprep.mubr.bf16.mxu0 0
        %1001 = vmatmul.mubr.bf16.gmra.mxu0 %v949
        %v1002 = vpop.f32.mrf.mxu0
        %v1003 = vadd.f32 0.0, %v1002
        %v1004 = vpop.f32.mrf.mxu0
        %v1005 = vadd.f32 0.0, %v1004
        %v1006 = vpop.f32.mrf.mxu0
        %v1007 = vadd.f32 0.0, %v1006
        %v1008 = vpop.f32.mrf.mxu0
        %v1009 = vadd.f32 0.0, %v1008
        %1010 = vdwg.mxu0
        %v1015 = vunpack.c.l.b16 %v918
        %v1016 = vunpack.c.l.b16 %v919
        %v1017 = vunpack.c.l.b16 %v920
        %v1018 = vunpack.c.l.b16 %v921
        %v1019 = vpack.c.b16 %v1016, %v1015
        %v1020 = vpack.c.b16 %v1018, %v1017
        %vm1021 = vcmask 64512
        %v1023 = vsel %vm1021, %v1019, 0
        %v1026 = vsel %vm1021, %v1020, 0
        %vm1028 = vcmask 1043456
        %v1030 = vsel %vm1028, %v922, 0
        %v1033 = vsel %vm1028, %v923, 0
        %1035 = vmatprep.subr.bf16.mxu0 0
        %1036 = vmatpush1.bf16.msra.mxu0 0
        %1037 = vmatprep.subr.bf16.mxu0 0
        %1038 = vmatpush1.bf16.msra.mxu0 0
        %1039 = vmatprep.subr.bf16.mxu0 0
        %1040 = vmatpush1.bf16.msra.mxu0 0
        %1041 = vmatprep.subr.bf16.mxu0 0
        %1042 = vmatpush1.bf16.msra.mxu0 0
        %1043 = vmatprep.subr.bf16.mxu0 0
        %1044 = vmatpush1.bf16.msra.mxu0 0
        %1045 = vmatprep.subr.bf16.mxu0 0
        %1046 = vmatpush1.bf16.msra.mxu0 0
        %1047 = vmatprep.subr.bf16.mxu0 0
        %1048 = vmatpush1.bf16.msra.mxu0 0
        %1049 = vmatprep.subr.bf16.mxu0 %v1033
        %1050 = vmatpush1.bf16.msra.mxu0 %v1030
        %1051 = vmatprep.subr.bf16.mxu0 0
        %1052 = vmatpush2.bf16.msra.mxu0 0
        %1053 = vmatprep.subr.bf16.mxu0 0
        %1054 = vmatpush2.bf16.msra.mxu0 0
        %1055 = vmatprep.subr.bf16.mxu0 0
        %1056 = vmatpush2.bf16.msra.mxu0 0
        %1057 = vmatprep.subr.bf16.mxu0 0
        %1058 = vmatpush2.bf16.msra.mxu0 0
        %1059 = vmatprep.subr.bf16.mxu0 0
        %1060 = vmatpush2.bf16.msra.mxu0 0
        %1061 = vmatprep.subr.bf16.mxu0 0
        %1062 = vmatpush2.bf16.msra.mxu0 0
        %1063 = vmatprep.subr.bf16.mxu0 0
        %1064 = vmatpush2.bf16.msra.mxu0 0
        %1065 = vmatprep.subr.bf16.mxu0 0
        %1066 = vmatpush2.bf16.msra.mxu0 0
        %1067 = vmatprep.mubr.bf16.mxu0 0
        %1068 = vmatmul.mubr.bf16.gmra.mxu0 %v1023
        %v1069 = vpop.f32.mrf.mxu0
        %v1070 = vadd.f32 %v993, %v1069
        %v1071 = vpop.f32.mrf.mxu0
        %v1072 = vadd.f32 %v995, %v1071
        %v1073 = vpop.f32.mrf.mxu0
        %v1074 = vadd.f32 %v997, %v1073
        %v1075 = vpop.f32.mrf.mxu0
        %v1076 = vadd.f32 %v999, %v1075
        %1077 = vmatprep.mubr.bf16.mxu0 0
        %1078 = vmatmul.mubr.bf16.gmra.mxu0 %v1026
        %v1079 = vpop.f32.mrf.mxu0
        %v1080 = vadd.f32 %v1003, %v1079
        %v1081 = vpop.f32.mrf.mxu0
        %v1082 = vadd.f32 %v1005, %v1081
        %v1083 = vpop.f32.mrf.mxu0
        %v1084 = vadd.f32 %v1007, %v1083
        %v1085 = vpop.f32.mrf.mxu0
        %v1086 = vadd.f32 %v1009, %v1085
        %1087 = vdwg.mxu0
        %v1088 = vld [vmem:[%s8] sm:$0xff]
        %v1089 = vld [vmem:[%s8 + $0x8] sm:$0xff]
        %v1090 = vld [vmem:[%s8 + $0x10] sm:$0xff]
        %v1091 = vld [vmem:[%s8 + $0x18] sm:$0xff]
        %1093 = vset.pattern.permute.xlu0 0
        %1094 = vperm.xlu0 %1093, %v1088
        %v1095 = vpop.permute.xlu0 %1094
        %1098 = vset.pattern.permute.xlu0 0
        %1099 = vperm.xlu0 %1098, %v1089
        %v1100 = vpop.permute.xlu0 %1099
        %1103 = vset.pattern.permute.xlu0 0
        %1104 = vperm.xlu0 %1103, %v1090
        %v1105 = vpop.permute.xlu0 %1104
        %1108 = vset.pattern.permute.xlu0 0
        %1109 = vperm.xlu0 %1108, %v1091
        %v1110 = vpop.permute.xlu0 %1109
        %v1112 = vadd.f32 %v1070, %v1095
        %v1113 = vadd.f32 %v1072, %v1095
        %v1114 = vadd.f32 %v1074, %v1100
        %v1115 = vadd.f32 %v1076, %v1100
        %v1116 = vadd.f32 %v1080, %v1105
        %v1117 = vadd.f32 %v1082, %v1105
        %v1118 = vadd.f32 %v1084, %v1110
        %v1119 = vadd.f32 %v1086, %v1110
        %v1120 = vmax.f32 %v1112, 0.0
        %v1121 = vmax.f32 %v1113, 0.0
        %v1122 = vmax.f32 %v1114, 0.0
        %v1123 = vmax.f32 %v1115, 0.0
        %v1124 = vmax.f32 %v1116, 0.0
        %v1125 = vmax.f32 %v1117, 0.0
        %v1126 = vmax.f32 %v1118, 0.0
        %v1127 = vmax.f32 %v1119, 0.0
        %v1128 = vld [vmem:[%s9] sm:$0xf]
        %v1129 = vld [vmem:[%s9 + $0x4] sm:$0xf]
        %v1130 = vpack.c.bf16 %v1122, %v1120
        %v1131 = vpack.c.bf16 %v1123, %v1121
        %v1132 = vpack.c.bf16 %v1126, %v1124
        %v1133 = vpack.c.bf16 %v1127, %v1125
        %v1134 = vld [vmem:[%s10] sm:$0xff]
        %v1135 = vld [vmem:[%s10 + $0x8] sm:$0xff]
        %1137 = vset.pattern.permute.xlu0 0
        %1138 = vperm.xlu0 %1137, %v1134
        %v1139 = vpop.permute.xlu0 %1138
        %1142 = vset.pattern.permute.xlu0 0
        %1143 = vperm.xlu0 %1142, %v1135
        %v1144 = vpop.permute.xlu0 %1143
        %v1148 = vunpack.c.l.b16 %v1128
        %v1149 = vunpack.c.l.b16 %v1129
        %v1150 = vpack.c.b16 %v1149, %v1148
        %vm1151 = vcmask 261120
        %v1153 = vsel %vm1151, %v1150, 0
        %1155 = vmatprep.subr.bf16.mxu0 0
        %1156 = vmatpush1.bf16.msra.mxu0 0
        %1157 = vmatprep.subr.bf16.mxu0 0
        %1158 = vmatpush1.bf16.msra.mxu0 0
        %1159 = vmatprep.subr.bf16.mxu0 0
        %1160 = vmatpush1.bf16.msra.mxu0 0
        %1161 = vmatprep.subr.bf16.mxu0 0
        %1162 = vmatpush1.bf16.msra.mxu0 0
        %1163 = vmatprep.subr.bf16.mxu0 0
        %1164 = vmatpush1.bf16.msra.mxu0 0
        %1165 = vmatprep.subr.bf16.mxu0 0
        %1166 = vmatpush1.bf16.msra.mxu0 0
        %1167 = vmatprep.subr.bf16.mxu0 %v1133
        %1168 = vmatpush1.bf16.msra.mxu0 %v1132
        %1169 = vmatprep.subr.bf16.mxu0 %v1131
        %1170 = vmatpush1.bf16.msra.mxu0 %v1130
        %1171 = vmatprep.subr.bf16.mxu0 0
        %1172 = vmatpush2.bf16.msra.mxu0 0
        %1173 = vmatprep.subr.bf16.mxu0 0
        %1174 = vmatpush2.bf16.msra.mxu0 0
        %1175 = vmatprep.subr.bf16.mxu0 0
        %1176 = vmatpush2.bf16.msra.mxu0 0
        %1177 = vmatprep.subr.bf16.mxu0 0
        %1178 = vmatpush2.bf16.msra.mxu0 0
        %1179 = vmatprep.subr.bf16.mxu0 0
        %1180 = vmatpush2.bf16.msra.mxu0 0
        %1181 = vmatprep.subr.bf16.mxu0 0
        %1182 = vmatpush2.bf16.msra.mxu0 0
        %1183 = vmatprep.subr.bf16.mxu0 0
        %1184 = vmatpush2.bf16.msra.mxu0 0
        %1185 = vmatprep.subr.bf16.mxu0 0
        %1186 = vmatpush2.bf16.msra.mxu0 0
        %1187 = vmatprep.mubr.bf16.mxu0 0
        %1188 = vmatmul.mubr.bf16.gmra.mxu0 %v1153
        %v1189 = vpop.f32.mrf.mxu0
        %v1190 = vadd.f32 %v1139, %v1189
        %v1191 = vpop.f32.mrf.mxu0
        %v1192 = vadd.f32 %v1139, %v1191
        %v1193 = vpop.f32.mrf.mxu0
        %v1194 = vadd.f32 %v1144, %v1193
        %v1195 = vpop.f32.mrf.mxu0
        %v1196 = vadd.f32 %v1144, %v1195
        %1197 = vdwg.mxu0
        %v1198 = vmax.f32 %v1190, 0.0
        %v1199 = vmax.f32 %v1192, 0.0
        %v1200 = vmax.f32 %v1194, 0.0
        %v1201 = vmax.f32 %v1196, 0.0
        %1202 = vst [vmem:[%s535] sm:$0xff] %v1198
        %1203 = vst [vmem:[%s535 + $0x8] sm:$0xff] %v1199
        %1204 = vst [vmem:[%s535 + $0x10] sm:$0xff] %v1200
        %1205 = vst [vmem:[%s535 + $0x18] sm:$0xff] %v1201
        %s1206 = sand.u32 %s314, 1
        %s1207 = scalar_lea.sflag [#allocation4], %s1206
        %s1208 = sand.u32 %s314, 1
        %s1209 = smul.addr %s1208, 32
        %s1210 = scalar_lea.vmem [#allocation3], %s1209
        // Predicated region
        $region103: #{tpu_custom_call.1} parent=97 // pred_check
          %p1211 = pneg %p324
        $region104: #{tpu_custom_call.1} parent=97 // pred_check_branch
          %1213 = sbr.rel (%p1211) target = $region106
        $region105: #{tpu_custom_call.1} parent=97 // pred_region
          %s1214 = smul.u32 2, %s30
          %s1216 = ssub.s32 512, 512
          %1217 = vsyncadd %s1207, %s1216
          %s1218 = smul.addr %s29, 8
          %s1219 = sadd.s32 %s1214, %s1218
          %s1220 = smul.addr %s1219, 128
          %s1221 = scalar_lea.hbm %s11, %s1220
          %s1222 = sshll.u32 %s1210, 4
          %s1223 = int_to_ptr.vmem [resolvable:$true] %s1222
          %1228 = dma.vmem_to_hbm [thread:$0]  %s1223, 512, %s1221, %s1207, 256, 512, 16
        $region106: #{tpu_custom_call.1} parent=97 // pred_fallthru
          _
      $region98: #{tpu_custom_call.1} parent=5 // pred_fallthru
        _
      %p1229 = scmp.le.s32.totalorder 2, %s20
      // Predicated region
      $region107: #{tpu_custom_call.1} parent=5 // pred_check
        %p1230 = pneg %p1229
      $region108: #{tpu_custom_call.1} parent=5 // pred_check_branch
        %1232 = sbr.rel (%p1230) target = $region110
      $region109: #{tpu_custom_call.1} parent=5 // pred_region
        %s1233 = ssub.s32 %s20, 2
        // Predicated region
        $region111: #{tpu_custom_call.1} parent=109 // pred_check
          %p1234 = pneg %p330
        $region112: #{tpu_custom_call.1} parent=109 // pred_check_branch
          %1236 = sbr.rel (%p1234) target = $region114
        $region113: #{tpu_custom_call.1} parent=109 // pred_region
          %s1237 = sand.u32 %s315, 1
          %s1238 = scalar_lea.sflag [#allocation4], %s1237
          %s1239 = sand.u32 %s315, 1
          %s1240 = smul.addr %s1239, 32
          %s1241 = scalar_lea.vmem [#allocation3], %s1240
          %1242 = dma.done %s1238, 512
        $region114: #{tpu_custom_call.1} parent=109 // pred_fallthru
          _
      $region110: #{tpu_custom_call.1} parent=5 // pred_fallthru
        _
    $region6: #{tpu_custom_call.1} parent=1 // loop_footer
      %s24 = sadd.s32 1, %s20
    $region7: #{tpu_custom_call.1} parent=1 // loop_footer_branch
      %19 = sbr.rel target = $region3
    $region8: #{tpu_custom_call.1} parent=1 // loop_exit
      _
    %1243 = vsyncpa [#allocation4], 1
    %s1244 = scalar_lea.sflag [#allocation4], 1
    %1245 = vsyncpa %s1244, 1

</llo_original>
